<compile_context>
chip_gen: v7x
topology: tpu7x:2x2x1
jax: 0.10.0
libtpu: 0.0.40
codegen_flags: <defaults>
</compile_context>

<pallas_src>
import functools
import math

import jax
import jax.numpy as jnp
from jax import lax
from jax.experimental import pallas as pl
from jax.experimental.pallas import tpu as pltpu


# ----------------------------------------------------------------------------
# Pass 1: project K and V for all heads, once per (batch, kv-tile).
# ----------------------------------------------------------------------------
def kv_proj_kernel(k_ref, v_ref, wk_ref, wv_ref, bk_ref, bv_ref, kp_ref, vp_ref):
    k = k_ref[0]                                                   # (lk_p, D) bf16
    v = v_ref[0]
    kp_ref[0] = (jnp.dot(k, wk_ref[...], preferred_element_type=jnp.float32)
                 + bk_ref[...]).astype(kp_ref.dtype)               # (lk_p, h*dk)
    vp_ref[0] = (jnp.dot(v, wv_ref[...], preferred_element_type=jnp.float32)
                 + bv_ref[...]).astype(vp_ref.dtype)


# ----------------------------------------------------------------------------
# Pass 2: fused flash MHA. One grid step = (batch b, q-tile qi, kv-tile ki).
# ----------------------------------------------------------------------------
def mha_attn_kernel(q_ref, kp_ref, vp_ref,
                    wq_ref, bq_ref, wo_ref, bo_ref,
                    o_ref,
                    qp_sc, m_sc, l_sc, acc_sc,
                    *, h, dk, scale, compute_dtype, exp_dtype):
    ki = pl.program_id(2)
    nk = pl.num_programs(2)
    lq_t = acc_sc.shape[0]

    # ---- per (b, q-tile) init: project Q for all heads, pre-scaled by 1/sqrt(dk),
    #      stored once as bf16 (no per-kv-step cast) ----
    @pl.when(ki == 0)
    def _init():
        q = q_ref[0]                                               # (lq_t, D) bf16
        qp = (jnp.dot(q, wq_ref[...], preferred_element_type=jnp.float32)
              + bq_ref[...]) * scale                               # scale folded into Q
        qp_sc[...] = qp.astype(qp_sc.dtype)                        # (lq_t, h*dk) bf16
        m_sc[...] = jnp.full_like(m_sc, -jnp.inf)
        l_sc[...] = jnp.zeros_like(l_sc)
        acc_sc[...] = jnp.zeros_like(acc_sc)

    # contract the dk dims directly: no explicit transpose of Kp
    dims = (((1,), (1,)), ((), ()))
    use_fori = (h >= 8) and (dk % 128 == 0)

    if not use_fori:
        # small h: static unroll (LLO sees everything)
        qp = qp_sc[...]                                            # (lq_t, h*dk) bf16
        kp = kp_ref[0]                                             # (lk_t, h*dk) bf16
        vp = vp_ref[0]
        for hd in range(h):
            s0, s1 = hd * dk, (hd + 1) * dk
            s = lax.dot_general(qp[:, s0:s1], kp[:, s0:s1], dims,
                                preferred_element_type=jnp.float32)   # (lq_t, lk_t)
            m_prev = m_sc[:, hd:hd + 1]
            m_new = jnp.maximum(m_prev, jnp.max(s, axis=-1, keepdims=True))
            alpha = jnp.exp(m_prev - m_new)
            p = jnp.exp((s - m_new).astype(exp_dtype))                # bf16 EUP on v6e/v7x
            l_sc[:, hd:hd + 1] = (alpha * l_sc[:, hd:hd + 1]
                                  + jnp.sum(p, axis=-1, keepdims=True,
                                            dtype=jnp.float32))
            acc_sc[:, s0:s1] = (alpha * acc_sc[:, s0:s1]
                                + jnp.dot(p.astype(compute_dtype), vp[:, s0:s1],
                                          preferred_element_type=jnp.float32))
            m_sc[:, hd:hd + 1] = m_new
    else:
        # many heads: bound live ranges of the (lq_t, lk_t) temporaries
        def body(hd, carry):
            off = pl.multiple_of(hd * dk, 128)
            qh = qp_sc[:, pl.ds(off, dk)]
            kh = kp_ref[0, :, pl.ds(off, dk)]
            vh = vp_ref[0, :, pl.ds(off, dk)]
            s = lax.dot_general(qh, kh, dims, preferred_element_type=jnp.float32)
            m_prev = m_sc[:, pl.ds(hd, 1)]
            m_new = jnp.maximum(m_prev, jnp.max(s, axis=-1, keepdims=True))
            alpha = jnp.exp(m_prev - m_new)
            p = jnp.exp((s - m_new).astype(exp_dtype))
            l_sc[:, pl.ds(hd, 1)] = (alpha * l_sc[:, pl.ds(hd, 1)]
                                     + jnp.sum(p, axis=-1, keepdims=True,
                                               dtype=jnp.float32))
            acc_sc[:, pl.ds(off, dk)] = (alpha * acc_sc[:, pl.ds(off, dk)]
                                         + jnp.dot(p.astype(compute_dtype), vh,
                                                   preferred_element_type=jnp.float32))
            m_sc[:, pl.ds(hd, 1)] = m_new
            return carry
        lax.fori_loop(0, h, body, 0, unroll=2)

    # ---- finalize: single broadcast normalize + fused W^O (lane-dense width D) ----
    @pl.when(ki == nk - 1)
    def _finalize():
        inv_l = pl.reciprocal(l_sc[...], approx=True)                 # (lq_t, h)
        inv_full = jnp.broadcast_to(inv_l[:, :, None],
                                    (lq_t, h, dk)).reshape(lq_t, h * dk)
        attn = (acc_sc[...] * inv_full).astype(compute_dtype)         # no concatenate
        o_ref[0] = (jnp.dot(attn, wo_ref[...], preferred_element_type=jnp.float32)
                    + bo_ref[...]).astype(o_ref.dtype)


# ----------------------------------------------------------------------------
# Python wrapper
# ----------------------------------------------------------------------------
def _pick_tile(n, target):
    """Largest tile <= target dividing n, multiple of 16 (bf16 sublane tile)."""
    if n <= target:
        return n
    for t in range(target, 15, -1):
        if n % t == 0 and t % 16 == 0:
            return t
    return n  # fall back to the full dimension (always legal)


def _tpu_vmem_bytes():
    try:
        return int(pltpu.get_tpu_info().vmem_capacity_bytes)
    except Exception:
        return 64 * 1024 * 1024  # conservative fallback


def _exp_dtype():
    """bf16 exponentials only where the EUP supports bf16 (v6e / v7x)."""
    try:
        kind = jax.devices()[0].device_kind.lower()
    except Exception:
        return jnp.float32
    if ("v6" in kind) or ("v7" in kind) or ("7x" in kind):
        return jnp.bfloat16
    return jnp.float32


def mha_forward(Q, K, V, params, *, compute_dtype=jnp.bfloat16,
                out_dtype=jnp.float32, q_tile_target=None, kv_tile_target=None):
    """Q: (B, Lq, D), K/V: (B, Lk, D). Returns (B, Lq, D) in out_dtype."""
    B, Lq, D = Q.shape
    _, Lk, _ = K.shape
    wq, wk, wv = params["wq"], params["wk"], params["wv"]   # (h, D, dk)
    bq, bk, bv = params["bq"], params["bk"], params["bv"]   # (h, 1, dk)
    wo, bo = params["wo"], params["bo"]                     # (h*dk, D), (1, D)
    h, _, dk = wq.shape
    Dh = h * dk

    # Generation-aware tiles / VMEM budget (v7x has 64 MiB per TC, v5e/v6e 128 MiB).
    vmem_cap = _tpu_vmem_bytes()
    small_vmem = vmem_cap < 100 * 1024 * 1024
    if q_tile_target is None:
        q_tile_target = 192 if small_vmem else 512
    if kv_tile_target is None:
        kv_tile_target = 256 if small_vmem else 512
    vmem_limit = min(int(vmem_cap * 0.70), 100 * 1024 * 1024)

    # Fuse per-head projection weights into single (D, h*dk) matrices so projection
    # matmuls use the full MXU N dimension; cast MXU operands to bf16.
    def fuse_w(w):
        return jnp.transpose(w, (1, 0, 2)).reshape(D, Dh).astype(compute_dtype)

    def fuse_b(b):
        return b.reshape(1, Dh).astype(jnp.float32)

    wq_f, wk_f, wv_f = fuse_w(wq), fuse_w(wk), fuse_w(wv)
    bq_f, bk_f, bv_f = fuse_b(bq), fuse_b(bk), fuse_b(bv)
    wo_c = wo.astype(compute_dtype)
    bo_f = bo.reshape(1, D).astype(jnp.float32)

    Qc = Q.astype(compute_dtype)
    Kc = K.astype(compute_dtype)
    Vc = V.astype(compute_dtype)

    exp_dtype = jnp.float32 if compute_dtype == jnp.float32 else _exp_dtype()

    lk_p = _pick_tile(Lk, kv_tile_target)
    nkp = Lk // lk_p
    lq_t = _pick_tile(Lq, q_tile_target)
    lk_t = _pick_tile(Lk, kv_tile_target)
    nq, nk = Lq // lq_t, Lk // lk_t

    def _run(single_buffer_weights):
        def const_spec(shape):
            """Grid-invariant operand: single-buffer it when supported (big VMEM win)."""
            idx = lambda *_: (0,) * len(shape)
            if single_buffer_weights and hasattr(pl, "Buffered"):
                try:
                    return pl.BlockSpec(shape, idx, pipeline_mode=pl.Buffered(1))
                except TypeError:
                    pass
            return pl.BlockSpec(shape, idx)

        # ---- pass 1: K/V projection, once per (b, kv-tile) — no per-q-tile redo ----
        kp, vp = pl.pallas_call(
            kv_proj_kernel,
            out_shape=(jax.ShapeDtypeStruct((B, Lk, Dh), compute_dtype),
                       jax.ShapeDtypeStruct((B, Lk, Dh), compute_dtype)),
            grid_spec=pltpu.PrefetchScalarGridSpec(
                num_scalar_prefetch=0,
                grid=(B, nkp),
                in_specs=[
                    pl.BlockSpec((1, lk_p, D), lambda b, i: (b, i, 0)),   # K
                    pl.BlockSpec((1, lk_p, D), lambda b, i: (b, i, 0)),   # V
                    const_spec((D, Dh)),                                  # Wk (fused heads)
                    const_spec((D, Dh)),                                  # Wv
                    const_spec((1, Dh)),                                  # bk
                    const_spec((1, Dh)),                                  # bv
                ],
                out_specs=[
                    pl.BlockSpec((1, lk_p, Dh), lambda b, i: (b, i, 0)),  # Kp
                    pl.BlockSpec((1, lk_p, Dh), lambda b, i: (b, i, 0)),  # Vp
                ]),
            compiler_params=pltpu.CompilerParams(
                dimension_semantics=("parallel", "parallel"),
                vmem_limit_bytes=vmem_limit),
        )(Kc, Vc, wk_f, wv_f, bk_f, bv_f)

        # ---- pass 2: fused flash MHA (Q proj + online softmax + W^O) ----
        kernel = functools.partial(
            mha_attn_kernel, h=h, dk=dk, scale=1.0 / math.sqrt(dk),
            compute_dtype=compute_dtype, exp_dtype=exp_dtype)

        itemsize = jnp.dtype(compute_dtype).itemsize
        flops = (2 * B * Lq * D * Dh          # Q projection
                 + 4 * B * Lq * Lk * Dh       # scores + PV
                 + 2 * B * Lq * Dh * D)       # output projection
        bytes_accessed = (itemsize * (Qc.size + 2 * B * Lk * Dh
                                      + wq_f.size + wo_c.size)
                          + jnp.dtype(out_dtype).itemsize * B * Lq * D)
        cost = pl.CostEstimate(flops=int(flops),
                               transcendentals=int(B * h * Lq * Lk),
                               bytes_accessed=int(bytes_accessed))

        # NOTE (v7x megacore): (B, nq) is sharded across 2 TCs; keep B*nq >= 2.
        return pl.pallas_call(
            kernel,
            out_shape=jax.ShapeDtypeStruct((B, Lq, D), out_dtype),
            grid_spec=pltpu.PrefetchScalarGridSpec(
                num_scalar_prefetch=0,
                grid=(B, nq, nk),
                in_specs=[
                    pl.BlockSpec((1, lq_t, D), lambda b, qi, ki: (b, qi, 0)),   # Q
                    pl.BlockSpec((1, lk_t, Dh), lambda b, qi, ki: (b, ki, 0)),  # Kp
                    pl.BlockSpec((1, lk_t, Dh), lambda b, qi, ki: (b, ki, 0)),  # Vp
                    const_spec((D, Dh)),                                        # Wq
                    const_spec((1, Dh)),                                        # bq
                    const_spec((Dh, D)),                                        # W_o
                    const_spec((1, D)),                                         # b_o
                ],
                out_specs=pl.BlockSpec((1, lq_t, D), lambda b, qi, ki: (b, qi, 0)),
                scratch_shapes=[
                    pltpu.VMEM((lq_t, Dh), compute_dtype),  # projected+scaled Q (bf16)
                    pltpu.VMEM((lq_t, h), jnp.float32),     # running max, per head
                    pltpu.VMEM((lq_t, h), jnp.float32),     # running denom, per head
                    pltpu.VMEM((lq_t, Dh), jnp.float32),    # unnormalized head outputs
                ]),
            compiler_params=pltpu.CompilerParams(
                dimension_semantics=("parallel", "parallel", "arbitrary"),
                vmem_limit_bytes=vmem_limit),
            cost_estimate=cost,
        )(Qc, kp, vp, wq_f, bq_f, wo_c, bo_f)

    try:
        return _run(True)
    except Exception:
        # Fallback if pipeline_mode=pl.Buffered(1) is unsupported in this build.
        return _run(False)


def init_params(key, dmodel, h):
    dk = dmodel // h
    ks = jax.random.split(key, 8)
    scale = 1.0 / math.sqrt(dmodel)
    return {
        "wq": jax.random.normal(ks[0], (h, dmodel, dk), jnp.float32) * scale,
        "wk": jax.random.normal(ks[1], (h, dmodel, dk), jnp.float32) * scale,
        "wv": jax.random.normal(ks[2], (h, dmodel, dk), jnp.float32) * scale,
        "bq": jax.random.normal(ks[3], (h, 1, dk), jnp.float32) * 0.01,
        "bk": jax.random.normal(ks[4], (h, 1, dk), jnp.float32) * 0.01,
        "bv": jax.random.normal(ks[5], (h, 1, dk), jnp.float32) * 0.01,
        "wo": jax.random.normal(ks[6], (h * dmodel // h * 1, dmodel), jnp.float32)[:h * dk] * scale,
        "bo": jax.random.normal(ks[7], (1, dmodel), jnp.float32) * 0.01,
    }


def mha_reference(Q, K, V, params, compute_dtype=jnp.bfloat16):
    """Plain-JAX reference mirroring the kernel's bf16-MXU / f32-accumulate math."""
    wq, wk, wv = params["wq"], params["wk"], params["wv"]
    bq, bk, bv = params["bq"], params["bk"], params["bv"]
    wo, bo = params["wo"], params["bo"]
    h, D, dk = wq.shape
    c = lambda x: x.astype(compute_dtype)
    outs = []
    for i in range(h):
        qp = jnp.einsum("bld,dk->blk", c(Q), c(wq[i]),
                        preferred_element_type=jnp.float32) + bq[i]
        kp = jnp.einsum("bnd,dk->bnk", c(K), c(wk[i]),
                        preferred_element_type=jnp.float32) + bk[i]
        vp = jnp.einsum("bnd,dk->bnk", c(V), c(wv[i]),
                        preferred_element_type=jnp.float32) + bv[i]
        s = jnp.einsum("blk,bnk->bln", c(qp), c(kp),
                       preferred_element_type=jnp.float32) / math.sqrt(dk)
        p = jax.nn.softmax(s, axis=-1)
        outs.append(jnp.einsum("bln,bnk->blk", c(p), c(vp),
                               preferred_element_type=jnp.float32))
    concat = jnp.concatenate(outs, axis=-1)
    return jnp.einsum("bld,de->ble", c(concat), c(wo),
                      preferred_element_type=jnp.float32) + bo


if __name__ == "__main__":
    # small config consistent with the module: h heads, dmodel divisible by h
    B, Lq, Lk, dmodel, h = 2, 8, 8, 32, 4

    key = jax.random.PRNGKey(0)
    kq, kk, kvk, kpk = jax.random.split(key, 4)
    Q = jax.random.normal(kq, (B, Lq, dmodel), jnp.float32)
    K = jax.random.normal(kk, (B, Lk, dmodel), jnp.float32)
    V = jax.random.normal(kvk, (B, Lk, dmodel), jnp.float32)
    params = init_params(kpk, dmodel, h)

    out = mha_forward(Q, K, V, params)
    out = jax.block_until_ready(out)

    ref = mha_reference(Q, K, V, params)
    assert out.shape == (B, Lq, dmodel)
    # tolerance accounts for bf16 MXU operands, bf16 EUP exp (v6e/v7x), approx recip
    assert jnp.allclose(out, ref, atol=4e-2, rtol=4e-2), "mismatch vs reference"

    print("KERNEL_OK")
</pallas_src>

<mosaic_0001>
module attributes {stable_mosaic.version = 11 : i64} {
  func.func @kv_proj_kernel(%arg0: i32, %arg1: i32, %arg2: memref<1x8x32xbf16, #tpu.memory_space<vmem>>, %arg3: memref<1x8x32xbf16, #tpu.memory_space<vmem>>, %arg4: memref<32x32xbf16, #tpu.memory_space<vmem>>, %arg5: memref<32x32xbf16, #tpu.memory_space<vmem>>, %arg6: memref<1x32xf32, #tpu.memory_space<vmem>>, %arg7: memref<1x32xf32, #tpu.memory_space<vmem>>, %arg8: memref<1x8x32xbf16, #tpu.memory_space<vmem>>, %arg9: memref<1x8x32xbf16, #tpu.memory_space<vmem>>) attributes {dimension_semantics = [#tpu.dimension_semantics<parallel>, #tpu.dimension_semantics<parallel>], iteration_bounds = array<i64: 2, 1>, scalar_prefetch = 0 : i64, scratch_operands = 0 : i64, tpu.core_type = #tpu.core_type<tc>, window_params = [{transform_indices = @transform_0, window_bounds = array<i64: 1, 8, 32>}, {transform_indices = @transform_1, window_bounds = array<i64: 1, 8, 32>}, {pipeline_mode = #tpu.pipeline_mode<synchronous>, transform_indices = @transform_2, window_bounds = array<i64: 32, 32>}, {pipeline_mode = #tpu.pipeline_mode<synchronous>, transform_indices = @transform_3, window_bounds = array<i64: 32, 32>}, {pipeline_mode = #tpu.pipeline_mode<synchronous>, transform_indices = @transform_4, window_bounds = array<i64: 1, 32>}, {pipeline_mode = #tpu.pipeline_mode<synchronous>, transform_indices = @transform_5, window_bounds = array<i64: 1, 32>}, {transform_indices = @transform_6, window_bounds = array<i64: 1, 8, 32>}, {transform_indices = @transform_7, window_bounds = array<i64: 1, 8, 32>}]} {
    %c0 = arith.constant 0 : index
    %c0_0 = arith.constant 0 : index
    %c0_1 = arith.constant 0 : index
    %0 = vector.load %arg2[%c0, %c0_0, %c0_1] : memref<1x8x32xbf16, #tpu.memory_space<vmem>>, vector<1x8x32xbf16>
    %1 = vector.shape_cast %0 : vector<1x8x32xbf16> to vector<8x32xbf16>
    %c0_2 = arith.constant 0 : index
    %c0_3 = arith.constant 0 : index
    %c0_4 = arith.constant 0 : index
    %2 = vector.load %arg3[%c0_2, %c0_3, %c0_4] : memref<1x8x32xbf16, #tpu.memory_space<vmem>>, vector<1x8x32xbf16>
    %3 = vector.shape_cast %2 : vector<1x8x32xbf16> to vector<8x32xbf16>
    %c0_5 = arith.constant 0 : index
    %c0_6 = arith.constant 0 : index
    %4 = vector.load %arg4[%c0_5, %c0_6] : memref<32x32xbf16, #tpu.memory_space<vmem>>, vector<32x32xbf16>
    %cst = arith.constant dense<0.000000e+00> : vector<8x32xf32>
    %5 = tpu.matmul %1, %4, %cst {dimension_numbers = #tpu.dot_dimension_numbers<[1], [0], [0], [1], [0, 0, 1, 1], [], []>} : vector<8x32xbf16>, vector<32x32xbf16>, vector<8x32xf32> -> vector<8x32xf32>
    %c0_7 = arith.constant 0 : index
    %c0_8 = arith.constant 0 : index
    %6 = vector.load %arg6[%c0_7, %c0_8] : memref<1x32xf32, #tpu.memory_space<vmem>>, vector<1x32xf32>
    %7 = vector.broadcast %6 : vector<1x32xf32> to vector<8x32xf32>
    %8 = arith.addf %5, %7 : vector<8x32xf32>
    %9 = arith.truncf %8 : vector<8x32xf32> to vector<8x32xbf16>
    %c0_9 = arith.constant 0 : index
    %c0_10 = arith.constant 0 : index
    %c0_11 = arith.constant 0 : index
    %10 = vector.load %arg8[%c0_9, %c0_10, %c0_11] : memref<1x8x32xbf16, #tpu.memory_space<vmem>>, vector<1x8x32xbf16>
    %11 = vector.shape_cast %10 : vector<1x8x32xbf16> to vector<8x32xbf16>
    %12 = vector.shape_cast %9 : vector<8x32xbf16> to vector<1x8x32xbf16>
    tpu.vector_store %arg8[%c0_9, %c0_10, %c0_11], %12 {strides = array<i32>} : memref<1x8x32xbf16, #tpu.memory_space<vmem>>, vector<1x8x32xbf16>,
    %c0_12 = arith.constant 0 : index
    %c0_13 = arith.constant 0 : index
    %13 = vector.load %arg5[%c0_12, %c0_13] : memref<32x32xbf16, #tpu.memory_space<vmem>>, vector<32x32xbf16>
    %cst_14 = arith.constant dense<0.000000e+00> : vector<8x32xf32>
    %14 = tpu.matmul %3, %13, %cst_14 {dimension_numbers = #tpu.dot_dimension_numbers<[1], [0], [0], [1], [0, 0, 1, 1], [], []>} : vector<8x32xbf16>, vector<32x32xbf16>, vector<8x32xf32> -> vector<8x32xf32>
    %c0_15 = arith.constant 0 : index
    %c0_16 = arith.constant 0 : index
    %15 = vector.load %arg7[%c0_15, %c0_16] : memref<1x32xf32, #tpu.memory_space<vmem>>, vector<1x32xf32>
    %16 = vector.broadcast %15 : vector<1x32xf32> to vector<8x32xf32>
    %17 = arith.addf %14, %16 : vector<8x32xf32>
    %18 = arith.truncf %17 : vector<8x32xf32> to vector<8x32xbf16>
    %c0_17 = arith.constant 0 : index
    %c0_18 = arith.constant 0 : index
    %c0_19 = arith.constant 0 : index
    %19 = vector.load %arg9[%c0_17, %c0_18, %c0_19] : memref<1x8x32xbf16, #tpu.memory_space<vmem>>, vector<1x8x32xbf16>
    %20 = vector.shape_cast %19 : vector<1x8x32xbf16> to vector<8x32xbf16>
    %21 = vector.shape_cast %18 : vector<8x32xbf16> to vector<1x8x32xbf16>
    tpu.vector_store %arg9[%c0_17, %c0_18, %c0_19], %21 {strides = array<i32>} : memref<1x8x32xbf16, #tpu.memory_space<vmem>>, vector<1x8x32xbf16>,
    return
  }
  func.func @transform_0(%arg0: i32, %arg1: i32) -> (i32, i32, i32) {
    %c0_i32 = arith.constant 0 : i32
    %c0_i32_0 = arith.constant 0 : i32
    return %arg0, %arg1, %c0_i32 : i32, i32, i32
  }
  func.func @transform_1(%arg0: i32, %arg1: i32) -> (i32, i32, i32) {
    %c0_i32 = arith.constant 0 : i32
    %c0_i32_0 = arith.constant 0 : i32
    return %arg0, %arg1, %c0_i32 : i32, i32, i32
  }
  func.func @transform_2(%arg0: i32, %arg1: i32) -> (i32, i32) {
    %c0_i32 = arith.constant 0 : i32
    %c0_i32_0 = arith.constant 0 : i32
    %c0_i32_1 = arith.constant 0 : i32
    return %c0_i32, %c0_i32_0 : i32, i32
  }
  func.func @transform_3(%arg0: i32, %arg1: i32) -> (i32, i32) {
    %c0_i32 = arith.constant 0 : i32
    %c0_i32_0 = arith.constant 0 : i32
    %c0_i32_1 = arith.constant 0 : i32
    return %c0_i32, %c0_i32_0 : i32, i32
  }
  func.func @transform_4(%arg0: i32, %arg1: i32) -> (i32, i32) {
    %c0_i32 = arith.constant 0 : i32
    %c0_i32_0 = arith.constant 0 : i32
    %c0_i32_1 = arith.constant 0 : i32
    return %c0_i32, %c0_i32_0 : i32, i32
  }
  func.func @transform_5(%arg0: i32, %arg1: i32) -> (i32, i32) {
    %c0_i32 = arith.constant 0 : i32
    %c0_i32_0 = arith.constant 0 : i32
    %c0_i32_1 = arith.constant 0 : i32
    return %c0_i32, %c0_i32_0 : i32, i32
  }
  func.func @transform_6(%arg0: i32, %arg1: i32) -> (i32, i32, i32) {
    %c0_i32 = arith.constant 0 : i32
    %c0_i32_0 = arith.constant 0 : i32
    return %arg0, %arg1, %c0_i32 : i32, i32, i32
  }
  func.func @transform_7(%arg0: i32, %arg1: i32) -> (i32, i32, i32) {
    %c0_i32 = arith.constant 0 : i32
    %c0_i32_0 = arith.constant 0 : i32
    return %arg0, %arg1, %c0_i32 : i32, i32, i32
  }
}

module attributes {stable_mosaic.version = 11 : i64} {
  func.func @kv_proj_kernel(%arg0: i32, %arg1: i32, %arg2: memref<1x8x32xbf16, #tpu.memory_space<vmem>>, %arg3: memref<1x8x32xbf16, #tpu.memory_space<vmem>>, %arg4: memref<32x32xbf16, #tpu.memory_space<vmem>>, %arg5: memref<32x32xbf16, #tpu.memory_space<vmem>>, %arg6: memref<1x32xf32, #tpu.memory_space<vmem>>, %arg7: memref<1x32xf32, #tpu.memory_space<vmem>>, %arg8: memref<1x8x32xbf16, #tpu.memory_space<vmem>>, %arg9: memref<1x8x32xbf16, #tpu.memory_space<vmem>>) attributes {dimension_semantics = [#tpu.dimension_semantics<parallel>, #tpu.dimension_semantics<parallel>], iteration_bounds = array<i64: 2, 1>, scalar_prefetch = 0 : i64, scratch_operands = 0 : i64, tpu.core_type = #tpu.core_type<tc>, window_params = [{transform_indices = @transform_0, window_bounds = array<i64: 1, 8, 32>}, {transform_indices = @transform_1, window_bounds = array<i64: 1, 8, 32>}, {pipeline_mode = #tpu.pipeline_mode<synchronous>, transform_indices = @transform_2, window_bounds = array<i64: 32, 32>}, {pipeline_mode = #tpu.pipeline_mode<synchronous>, transform_indices = @transform_3, window_bounds = array<i64: 32, 32>}, {pipeline_mode = #tpu.pipeline_mode<synchronous>, transform_indices = @transform_4, window_bounds = array<i64: 1, 32>}, {pipeline_mode = #tpu.pipeline_mode<synchronous>, transform_indices = @transform_5, window_bounds = array<i64: 1, 32>}, {transform_indices = @transform_6, window_bounds = array<i64: 1, 8, 32>}, {transform_indices = @transform_7, window_bounds = array<i64: 1, 8, 32>}]} {
    %c0 = arith.constant 0 : index
    %c0_0 = arith.constant 0 : index
    %c0_1 = arith.constant 0 : index
    %0 = vector.load %arg2[%c0, %c0_0, %c0_1] : memref<1x8x32xbf16, #tpu.memory_space<vmem>>, vector<1x8x32xbf16>
    %1 = vector.shape_cast %0 : vector<1x8x32xbf16> to vector<8x32xbf16>
    %c0_2 = arith.constant 0 : index
    %c0_3 = arith.constant 0 : index
    %c0_4 = arith.constant 0 : index
    %2 = vector.load %arg3[%c0_2, %c0_3, %c0_4] : memref<1x8x32xbf16, #tpu.memory_space<vmem>>, vector<1x8x32xbf16>
    %3 = vector.shape_cast %2 : vector<1x8x32xbf16> to vector<8x32xbf16>
    %c0_5 = arith.constant 0 : index
    %c0_6 = arith.constant 0 : index
    %4 = vector.load %arg4[%c0_5, %c0_6] : memref<32x32xbf16, #tpu.memory_space<vmem>>, vector<32x32xbf16>
    %cst = arith.constant dense<0.000000e+00> : vector<8x32xf32>
    %5 = tpu.matmul %1, %4, %cst {dimension_numbers = #tpu.dot_dimension_numbers<[1], [0], [0], [1], [0, 0, 1, 1], [], []>} : vector<8x32xbf16>, vector<32x32xbf16>, vector<8x32xf32> -> vector<8x32xf32>
    %c0_7 = arith.constant 0 : index
    %c0_8 = arith.constant 0 : index
    %6 = vector.load %arg6[%c0_7, %c0_8] : memref<1x32xf32, #tpu.memory_space<vmem>>, vector<1x32xf32>
    %7 = vector.broadcast %6 : vector<1x32xf32> to vector<8x32xf32>
    %8 = arith.addf %5, %7 : vector<8x32xf32>
    %9 = arith.truncf %8 : vector<8x32xf32> to vector<8x32xbf16>
    %c0_9 = arith.constant 0 : index
    %c0_10 = arith.constant 0 : index
    %c0_11 = arith.constant 0 : index
    %10 = vector.load %arg8[%c0_9, %c0_10, %c0_11] : memref<1x8x32xbf16, #tpu.memory_space<vmem>>, vector<1x8x32xbf16>
    %11 = vector.shape_cast %10 : vector<1x8x32xbf16> to vector<8x32xbf16>
    %12 = vector.shape_cast %9 : vector<8x32xbf16> to vector<1x8x32xbf16>
    tpu.vector_store %arg8[%c0_9, %c0_10, %c0_11], %12 {strides = array<i32>} : memref<1x8x32xbf16, #tpu.memory_space<vmem>>, vector<1x8x32xbf16>,
    %c0_12 = arith.constant 0 : index
    %c0_13 = arith.constant 0 : index
    %13 = vector.load %arg5[%c0_12, %c0_13] : memref<32x32xbf16, #tpu.memory_space<vmem>>, vector<32x32xbf16>
    %cst_14 = arith.constant dense<0.000000e+00> : vector<8x32xf32>
    %14 = tpu.matmul %3, %13, %cst_14 {dimension_numbers = #tpu.dot_dimension_numbers<[1], [0], [0], [1], [0, 0, 1, 1], [], []>} : vector<8x32xbf16>, vector<32x32xbf16>, vector<8x32xf32> -> vector<8x32xf32>
    %c0_15 = arith.constant 0 : index
    %c0_16 = arith.constant 0 : index
    %15 = vector.load %arg7[%c0_15, %c0_16] : memref<1x32xf32, #tpu.memory_space<vmem>>, vector<1x32xf32>
    %16 = vector.broadcast %15 : vector<1x32xf32> to vector<8x32xf32>
    %17 = arith.addf %14, %16 : vector<8x32xf32>
    %18 = arith.truncf %17 : vector<8x32xf32> to vector<8x32xbf16>
    %c0_17 = arith.constant 0 : index
    %c0_18 = arith.constant 0 : index
    %c0_19 = arith.constant 0 : index
    %19 = vector.load %arg9[%c0_17, %c0_18, %c0_19] : memref<1x8x32xbf16, #tpu.memory_space<vmem>>, vector<1x8x32xbf16>
    %20 = vector.shape_cast %19 : vector<1x8x32xbf16> to vector<8x32xbf16>
    %21 = vector.shape_cast %18 : vector<8x32xbf16> to vector<1x8x32xbf16>
    tpu.vector_store %arg9[%c0_17, %c0_18, %c0_19], %21 {strides = array<i32>} : memref<1x8x32xbf16, #tpu.memory_space<vmem>>, vector<1x8x32xbf16>,
    return
  }
  func.func @transform_0(%arg0: i32, %arg1: i32) -> (i32, i32, i32) {
    %c0_i32 = arith.constant 0 : i32
    %c0_i32_0 = arith.constant 0 : i32
    return %arg0, %arg1, %c0_i32 : i32, i32, i32
  }
  func.func @transform_1(%arg0: i32, %arg1: i32) -> (i32, i32, i32) {
    %c0_i32 = arith.constant 0 : i32
    %c0_i32_0 = arith.constant 0 : i32
    return %arg0, %arg1, %c0_i32 : i32, i32, i32
  }
  func.func @transform_2(%arg0: i32, %arg1: i32) -> (i32, i32) {
    %c0_i32 = arith.constant 0 : i32
    %c0_i32_0 = arith.constant 0 : i32
    %c0_i32_1 = arith.constant 0 : i32
    return %c0_i32, %c0_i32_0 : i32, i32
  }
  func.func @transform_3(%arg0: i32, %arg1: i32) -> (i32, i32) {
    %c0_i32 = arith.constant 0 : i32
    %c0_i32_0 = arith.constant 0 : i32
    %c0_i32_1 = arith.constant 0 : i32
    return %c0_i32, %c0_i32_0 : i32, i32
  }
  func.func @transform_4(%arg0: i32, %arg1: i32) -> (i32, i32) {
    %c0_i32 = arith.constant 0 : i32
    %c0_i32_0 = arith.constant 0 : i32
    %c0_i32_1 = arith.constant 0 : i32
    return %c0_i32, %c0_i32_0 : i32, i32
  }
  func.func @transform_5(%arg0: i32, %arg1: i32) -> (i32, i32) {
    %c0_i32 = arith.constant 0 : i32
    %c0_i32_0 = arith.constant 0 : i32
    %c0_i32_1 = arith.constant 0 : i32
    return %c0_i32, %c0_i32_0 : i32, i32
  }
  func.func @transform_6(%arg0: i32, %arg1: i32) -> (i32, i32, i32) {
    %c0_i32 = arith.constant 0 : i32
    %c0_i32_0 = arith.constant 0 : i32
    return %arg0, %arg1, %c0_i32 : i32, i32, i32
  }
  func.func @transform_7(%arg0: i32, %arg1: i32) -> (i32, i32, i32) {
    %c0_i32 = arith.constant 0 : i32
    %c0_i32_0 = arith.constant 0 : i32
    return %arg0, %arg1, %c0_i32 : i32, i32, i32
  }
}

</mosaic_0001>

<llo_original>
// kernel: tpu_custom_call.1
$region0: #{tpu_custom_call.1}
  #allocation0 [shape = 'u32[]', space=smem, size = 0x4, offset = 0x4, fixed_abs, tag = 'smem constant byte address 0x4 - core index']
  #allocation1 [shape = 'u32[144,128]{1,0:T(1,128)}', space=vmem, size = 0x12000, scoped, tag = 'internal scratch']
  %s0 = inlined_call_operand.hbm [shape: bf16[2,8,32], index: 0, kind: input, shape index: {}]
  %s1 = inlined_call_operand.hbm [shape: bf16[2,8,32], index: 1, kind: input, shape index: {}]
  %s2 = inlined_call_operand.hbm [shape: bf16[32,32], index: 2, kind: input, shape index: {}]
  %s3 = inlined_call_operand.hbm [shape: bf16[32,32], index: 3, kind: input, shape index: {}]
  %s4 = inlined_call_operand.vmem [shape: f32[1,32], index: 4, kind: input, shape index: {}]
  %s5 = inlined_call_operand.vmem [shape: f32[1,32], index: 5, kind: input, shape index: {}]
  %s6 = inlined_call_operand.hbm [shape: bf16[2,8,32], index: 6, kind: output, shape index: {0}]
  %s7 = inlined_call_operand.hbm [shape: bf16[2,8,32], index: 7, kind: output, shape index: {1}]
  %8 = xla_tuple %s6, %s7
  %s9 = sld [smem:[#allocation0]]
  $region81: #{tpu_custom_call.1} parent=0
    _
  %s11 = ssub.s32 1, %s9
  %s12 = scalar_select 0, %s11, %s9
  $region1: #{tpu_custom_call.1} parent=0
    #allocation2 [shape = 'u8[4096]{0}', space=vmem, size = 0x1000, scoped, tag = 'input window, operand 0']
    #allocation3 [shape = 's32[2]{0}', space=sflag, size = 0x8, scoped, tag = 'scoped memory for tpu_custom_call.1']
    #allocation4 [shape = 's32[2]{0}', space=sflag, size = 0x8, scoped, tag = 'scoped memory for tpu_custom_call.1']
    #allocation5 [shape = 'u8[4096]{0}', space=vmem, size = 0x1000, scoped, tag = 'input window, operand 1']
    #allocation6 [shape = 's32[2]{0}', space=sflag, size = 0x8, scoped, tag = 'scoped memory for tpu_custom_call.1']
    #allocation7 [shape = 'u8[8192]{0}', space=vmem, size = 0x2000, scoped, tag = 'input window, operand 2, single buffered']
    #allocation8 [shape = 'u8[8192]{0}', space=vmem, size = 0x2000, scoped, tag = 'input window, operand 3, single buffered']
    #allocation9 [shape = 's32[1]{0}', space=sflag, size = 0x4, scoped, tag = 'scoped memory for tpu_custom_call.1']
    #allocation10 [shape = 'u8[4096]{0}', space=vmem, size = 0x1000, scoped, tag = 'output window, operand 0']
    #allocation11 [shape = 'u8[4096]{0}', space=vmem, size = 0x1000, scoped, tag = 'output window, operand 1']
    #allocation12 [shape = 's32[2]{0}', space=sflag, size = 0x8, scoped, tag = 'scoped memory for tpu_custom_call.1']
    %13 = vsyncpa [#allocation3], 0
    %s14 = scalar_lea.sflag [#allocation3], 1
    %15 = vsyncpa %s14, 0
    %16 = vsyncpa [#allocation6], 0
    %s17 = scalar_lea.sflag [#allocation6], 1
    %18 = vsyncpa %s17, 0
    %19 = vsyncpa [#allocation9], 0
    %20 = vsyncpa [#allocation4], 0
    %s21 = scalar_lea.sflag [#allocation4], 1
    %22 = vsyncpa %s21, 0
    %23 = vsyncpa [#allocation12], 0
    %s24 = scalar_lea.sflag [#allocation12], 1
    %25 = vsyncpa %s24, 0
    loop: start=0, step=1, limit=4
    $region2: #{tpu_custom_call.1} parent=1 // loop_pre_header
      _
    $region3: #{tpu_custom_call.1} parent=1 // loop_header
      %s27 = sphi 0, %s31
      %p28 = scmp.ge.s32.totalorder %s27, 4
      %s34 = sphi 0, %s46
      %s35 = sphi 0, %s42
      %s36 = sphi 0, %s34
      %s37 = sphi 0, %s35
      %s38 = sphi 0, %s36
      %s39 = sphi 0, %s37
      %s51 = sphi 0, %s53
      %s54 = sphi 0, %s51
      %s55 = sphi 0, %s54
      %s71 = sphi 0, %s55
      %s79 = sphi 0, %s81
      %s82 = sphi 0, %s79
      %s83 = sphi 0, %s82
      %s99 = sphi 0, %s83
      %s103 = sphi 0, %s103
      %s105 = sphi 0, %s103
      %s106 = sphi 0, %s105
      %s120 = sphi 0, %s106
      %s124 = sphi 0, %s124
      %s126 = sphi 0, %s124
      %s127 = sphi 0, %s126
      %s141 = sphi 0, %s127
      %s145 = sphi 0, %s145
      %s147 = sphi 0, %s145
      %s148 = sphi 0, %s147
      %s162 = sphi 0, %s148
      %s166 = sphi 0, %s166
      %s168 = sphi 0, %s166
      %s169 = sphi 0, %s168
      %s183 = sphi 0, %s169
      %s191 = sphi 0, %s193
      %s194 = sphi 0, %s191
      %s195 = sphi 0, %s194
      %s211 = sphi 0, %s195
      %s219 = sphi 0, %s221
      %s222 = sphi 0, %s219
      %s223 = sphi 0, %s222
      %s239 = sphi 0, %s223
    $region4: #{tpu_custom_call.1} parent=1 // loop_header_branch
      %30 = sbr.rel (%p28) target = $region8
    $region5: #{tpu_custom_call.1} parent=1 // loop_body
      %s32 = ssub.s32 %s27, 1
      %s33 = ssub.s32 %s27, 2
      %s40 = sadd.s32 1, %s35
      %p41 = scmp.ge.s32.totalorder %s40, 1
      %s42 = scalar_select %p41, 0, %s40
      %s43 = sadd.s32 1, %s34
      %s44 = scalar_select %p41, %s43, %s34
      %p45 = scmp.ge.s32.totalorder %s44, 2
      %s46 = scalar_select %p45, 0, %s44
      %s47 = ssub.s32 %s34, %s46
      %s48 = ssub.s32 %s35, %s42
      %s49 = sor.u32 %s47, %s48
      %p50 = scmp.eq.s32.totalorder %s49, 0
      %s52 = sadd.s32 %s51, 1
      %s53 = scalar_select %p50, %s51, %s52
      %p56 = pneg %p50
      %p57 = scmp.eq.s32.totalorder %s27, 1
      %p58 = por %p56, %p57
      %p59 = scmp.ne.s32.totalorder %s51, %s54
      %p60 = scmp.eq.s32.totalorder %s27, 0
      %p61 = por %p59, %p60
      %p62 = scmp.ne.s32.totalorder %s51, %s54
      %p63 = scmp.eq.s32.totalorder %s32, 1
      %p64 = por %p62, %p63
      %p65 = scmp.ne.s32.totalorder %s54, %s55
      %p66 = scmp.eq.s32.totalorder %s32, 0
      %p67 = por %p65, %p66
      %p68 = scmp.ne.s32.totalorder %s54, %s55
      %p69 = scmp.eq.s32.totalorder %s33, 1
      %p70 = por %p68, %p69
      %p72 = scmp.ne.s32.totalorder %s55, %s71
      %p73 = scmp.eq.s32.totalorder %s33, 0
      %p74 = por %p72, %p73
      %s75 = ssub.s32 %s34, %s46
      %s76 = ssub.s32 %s35, %s42
      %s77 = sor.u32 %s75, %s76
      %p78 = scmp.eq.s32.totalorder %s77, 0
      %s80 = sadd.s32 %s79, 1
      %s81 = scalar_select %p78, %s79, %s80
      %p84 = pneg %p78
      %p85 = scmp.eq.s32.totalorder %s27, 1
      %p86 = por %p84, %p85
      %p87 = scmp.ne.s32.totalorder %s79, %s82
      %p88 = scmp.eq.s32.totalorder %s27, 0
      %p89 = por %p87, %p88
      %p90 = scmp.ne.s32.totalorder %s79, %s82
      %p91 = scmp.eq.s32.totalorder %s32, 1
      %p92 = por %p90, %p91
      %p93 = scmp.ne.s32.totalorder %s82, %s83
      %p94 = scmp.eq.s32.totalorder %s32, 0
      %p95 = por %p93, %p94
      %p96 = scmp.ne.s32.totalorder %s82, %s83
      %p97 = scmp.eq.s32.totalorder %s33, 1
      %p98 = por %p96, %p97
      %p100 = scmp.ne.s32.totalorder %s83, %s99
      %p101 = scmp.eq.s32.totalorder %s33, 0
      %p102 = por %p100, %p101
      %s104 = sadd.s32 %s103, 1
      %p107 = scmp.eq.s32.totalorder %s27, 1
      %p108 = scmp.ne.s32.totalorder %s103, %s105
      %p109 = scmp.eq.s32.totalorder %s27, 0
      %p110 = por %p108, %p109
      %p111 = scmp.ne.s32.totalorder %s103, %s105
      %p112 = scmp.eq.s32.totalorder %s32, 1
      %p113 = por %p111, %p112
      %p114 = scmp.ne.s32.totalorder %s105, %s106
      %p115 = scmp.eq.s32.totalorder %s32, 0
      %p116 = por %p114, %p115
      %p117 = scmp.ne.s32.totalorder %s105, %s106
      %p118 = scmp.eq.s32.totalorder %s33, 1
      %p119 = por %p117, %p118
      %p121 = scmp.ne.s32.totalorder %s106, %s120
      %p122 = scmp.eq.s32.totalorder %s33, 0
      %p123 = por %p121, %p122
      %s125 = sadd.s32 %s124, 1
      %p128 = scmp.eq.s32.totalorder %s27, 1
      %p129 = scmp.ne.s32.totalorder %s124, %s126
      %p130 = scmp.eq.s32.totalorder %s27, 0
      %p131 = por %p129, %p130
      %p132 = scmp.ne.s32.totalorder %s124, %s126
      %p133 = scmp.eq.s32.totalorder %s32, 1
      %p134 = por %p132, %p133
      %p135 = scmp.ne.s32.totalorder %s126, %s127
      %p136 = scmp.eq.s32.totalorder %s32, 0
      %p137 = por %p135, %p136
      %p138 = scmp.ne.s32.totalorder %s126, %s127
      %p139 = scmp.eq.s32.totalorder %s33, 1
      %p140 = por %p138, %p139
      %p142 = scmp.ne.s32.totalorder %s127, %s141
      %p143 = scmp.eq.s32.totalorder %s33, 0
      %p144 = por %p142, %p143
      %s146 = sadd.s32 %s145, 1
      %p149 = scmp.eq.s32.totalorder %s27, 1
      %p150 = scmp.ne.s32.totalorder %s145, %s147
      %p151 = scmp.eq.s32.totalorder %s27, 0
      %p152 = por %p150, %p151
      %p153 = scmp.ne.s32.totalorder %s145, %s147
      %p154 = scmp.eq.s32.totalorder %s32, 1
      %p155 = por %p153, %p154
      %p156 = scmp.ne.s32.totalorder %s147, %s148
      %p157 = scmp.eq.s32.totalorder %s32, 0
      %p158 = por %p156, %p157
      %p159 = scmp.ne.s32.totalorder %s147, %s148
      %p160 = scmp.eq.s32.totalorder %s33, 1
      %p161 = por %p159, %p160
      %p163 = scmp.ne.s32.totalorder %s148, %s162
      %p164 = scmp.eq.s32.totalorder %s33, 0
      %p165 = por %p163, %p164
      %s167 = sadd.s32 %s166, 1
      %p170 = scmp.eq.s32.totalorder %s27, 1
      %p171 = scmp.ne.s32.totalorder %s166, %s168
      %p172 = scmp.eq.s32.totalorder %s27, 0
      %p173 = por %p171, %p172
      %p174 = scmp.ne.s32.totalorder %s166, %s168
      %p175 = scmp.eq.s32.totalorder %s32, 1
      %p176 = por %p174, %p175
      %p177 = scmp.ne.s32.totalorder %s168, %s169
      %p178 = scmp.eq.s32.totalorder %s32, 0
      %p179 = por %p177, %p178
      %p180 = scmp.ne.s32.totalorder %s168, %s169
      %p181 = scmp.eq.s32.totalorder %s33, 1
      %p182 = por %p180, %p181
      %p184 = scmp.ne.s32.totalorder %s169, %s183
      %p185 = scmp.eq.s32.totalorder %s33, 0
      %p186 = por %p184, %p185
      %s187 = ssub.s32 %s34, %s46
      %s188 = ssub.s32 %s35, %s42
      %s189 = sor.u32 %s187, %s188
      %p190 = scmp.eq.s32.totalorder %s189, 0
      %s192 = sadd.s32 %s191, 1
      %s193 = scalar_select %p190, %s191, %s192
      %p196 = pneg %p190
      %p197 = scmp.eq.s32.totalorder %s27, 1
      %p198 = por %p196, %p197
      %p199 = scmp.ne.s32.totalorder %s191, %s194
      %p200 = scmp.eq.s32.totalorder %s27, 0
      %p201 = por %p199, %p200
      %p202 = scmp.ne.s32.totalorder %s191, %s194
      %p203 = scmp.eq.s32.totalorder %s32, 1
      %p204 = por %p202, %p203
      %p205 = scmp.ne.s32.totalorder %s194, %s195
      %p206 = scmp.eq.s32.totalorder %s32, 0
      %p207 = por %p205, %p206
      %p208 = scmp.ne.s32.totalorder %s194, %s195
      %p209 = scmp.eq.s32.totalorder %s33, 1
      %p210 = por %p208, %p209
      %p212 = scmp.ne.s32.totalorder %s195, %s211
      %p213 = scmp.eq.s32.totalorder %s33, 0
      %p214 = por %p212, %p213
      %s215 = ssub.s32 %s34, %s46
      %s216 = ssub.s32 %s35, %s42
      %s217 = sor.u32 %s215, %s216
      %p218 = scmp.eq.s32.totalorder %s217, 0
      %s220 = sadd.s32 %s219, 1
      %s221 = scalar_select %p218, %s219, %s220
      %p224 = pneg %p218
      %p225 = scmp.eq.s32.totalorder %s27, 1
      %p226 = por %p224, %p225
      %p227 = scmp.ne.s32.totalorder %s219, %s222
      %p228 = scmp.eq.s32.totalorder %s27, 0
      %p229 = por %p227, %p228
      %p230 = scmp.ne.s32.totalorder %s219, %s222
      %p231 = scmp.eq.s32.totalorder %s32, 1
      %p232 = por %p230, %p231
      %p233 = scmp.ne.s32.totalorder %s222, %s223
      %p234 = scmp.eq.s32.totalorder %s32, 0
      %p235 = por %p233, %p234
      %p236 = scmp.ne.s32.totalorder %s222, %s223
      %p237 = scmp.eq.s32.totalorder %s33, 1
      %p238 = por %p236, %p237
      %p240 = scmp.ne.s32.totalorder %s223, %s239
      %p241 = scmp.eq.s32.totalorder %s33, 0
      %p242 = por %p240, %p241
      %p243 = scmp.le.s32.totalorder 1, %s27
      %p244 = scmp.lt.s32.totalorder %s27, 3
      %p245 = pnand %p243, %p244
      %p246 = pneg %p245
      // Predicated region
      $region9: #{tpu_custom_call.1} parent=5 // pred_check
        _
      $region10: #{tpu_custom_call.1} parent=5 // pred_check_branch
        %248 = sbr.rel (%p245) target = $region12
      $region11: #{tpu_custom_call.1} parent=5 // pred_region
        %s249 = ssub.s32 %s27, 1
        // Predicated region
        $region13: #{tpu_custom_call.1} parent=11 // pred_check
          %p250 = pneg %p116
        $region14: #{tpu_custom_call.1} parent=11 // pred_check_branch
          %252 = sbr.rel (%p250) target = $region16
        $region15: #{tpu_custom_call.1} parent=11 // pred_region
          %s254 = ssub.s32 256, 256
          %255 = vsyncadd [#allocation6], %s254
          %s256 = sshll.u32 [#allocation7], 4
          %s257 = int_to_ptr.vmem [resolvable:$true] %s256
          %262 = dma.hbm_to_vmem [thread:$0]  %s2, 256, %s257, [#allocation6], 64, 64, 4
        $region16: #{tpu_custom_call.1} parent=11 // pred_fallthru
          _
        // Predicated region
        $region17: #{tpu_custom_call.1} parent=11 // pred_check
          %p263 = pneg %p137
        $region18: #{tpu_custom_call.1} parent=11 // pred_check_branch
          %265 = sbr.rel (%p263) target = $region20
        $region19: #{tpu_custom_call.1} parent=11 // pred_region
          %s267 = ssub.s32 256, 256
          %268 = vsyncadd [#allocation9], %s267
          %s269 = sshll.u32 [#allocation8], 4
          %s270 = int_to_ptr.vmem [resolvable:$true] %s269
          %275 = dma.hbm_to_vmem [thread:$0]  %s3, 256, %s270, [#allocation9], 64, 64, 4
        $region20: #{tpu_custom_call.1} parent=11 // pred_fallthru
          _
        // Predicated region
        $region21: #{tpu_custom_call.1} parent=11 // pred_check
          %p276 = pneg %p158
        $region22: #{tpu_custom_call.1} parent=11 // pred_check_branch
          %278 = sbr.rel (%p276) target = $region24
        $region23: #{tpu_custom_call.1} parent=11 // pred_region
          _
        $region24: #{tpu_custom_call.1} parent=11 // pred_fallthru
          _
        // Predicated region
        $region25: #{tpu_custom_call.1} parent=11 // pred_check
          %p279 = pneg %p179
        $region26: #{tpu_custom_call.1} parent=11 // pred_check_branch
          %281 = sbr.rel (%p279) target = $region28
        $region27: #{tpu_custom_call.1} parent=11 // pred_region
          _
        $region28: #{tpu_custom_call.1} parent=11 // pred_fallthru
          _
      $region12: #{tpu_custom_call.1} parent=5 // pred_fallthru
        _
      %p282 = scmp.lt.s32.totalorder %s27, 2
      // Predicated region
      $region29: #{tpu_custom_call.1} parent=5 // pred_check
        %p283 = pneg %p282
      $region30: #{tpu_custom_call.1} parent=5 // pred_check_branch
        %285 = sbr.rel (%p283) target = $region32
      $region31: #{tpu_custom_call.1} parent=5 // pred_region
        // Predicated region
        $region33: #{tpu_custom_call.1} parent=31 // pred_check
          %p286 = pneg %p61
        $region34: #{tpu_custom_call.1} parent=31 // pred_check_branch
          %288 = sbr.rel (%p286) target = $region36
        $region35: #{tpu_custom_call.1} parent=31 // pred_region
          %s289 = sand.u32 %s51, 1
          %s290 = scalar_lea.sflag [#allocation3], %s289
          %s291 = sand.u32 %s51, 1
          %s292 = smul.addr %s291, 4
          %s293 = scalar_lea.vmem [#allocation2], %s292
          %s295 = ssub.s32 64, 64
          %296 = vsyncadd %s290, %s295
          %s297 = sadd.s32 %s35, %s34
          %s298 = smul.addr %s297, 64
          %s299 = scalar_lea.hbm %s0, %s298
          %s301 = sshll.u32 %s293, 4
          %s302 = int_to_ptr.vmem [resolvable:$true] %s301
          %304 = dma.hbm_to_vmem [thread:$0]  %s299, 64, %s302, %s290
        $region36: #{tpu_custom_call.1} parent=31 // pred_fallthru
          _
        // Predicated region
        $region37: #{tpu_custom_call.1} parent=31 // pred_check
          %p305 = pneg %p89
        $region38: #{tpu_custom_call.1} parent=31 // pred_check_branch
          %307 = sbr.rel (%p305) target = $region40
        $region39: #{tpu_custom_call.1} parent=31 // pred_region
          %s308 = sand.u32 %s27, 1
          %s309 = scalar_lea.sflag [#allocation6], %s308
          %s310 = sand.u32 %s79, 1
          %s311 = smul.addr %s310, 4
          %s312 = scalar_lea.vmem [#allocation5], %s311
          %s314 = ssub.s32 64, 64
          %315 = vsyncadd %s309, %s314
          %s316 = sadd.s32 %s35, %s34
          %s317 = smul.addr %s316, 64
          %s318 = scalar_lea.hbm %s1, %s317
          %s320 = sshll.u32 %s312, 4
          %s321 = int_to_ptr.vmem [resolvable:$true] %s320
          %323 = dma.hbm_to_vmem [thread:$0]  %s318, 64, %s321, %s309
        $region40: #{tpu_custom_call.1} parent=31 // pred_fallthru
          _
      $region32: #{tpu_custom_call.1} parent=5 // pred_fallthru
        _
      %p324 = scmp.le.s32.totalorder 1, %s27
      %p325 = scmp.lt.s32.totalorder %s27, 3
      %p326 = pnand %p324, %p325
      %p327 = pneg %p326
      // Predicated region
      $region41: #{tpu_custom_call.1} parent=5 // pred_check
        _
      $region42: #{tpu_custom_call.1} parent=5 // pred_check_branch
        %329 = sbr.rel (%p326) target = $region44
      $region43: #{tpu_custom_call.1} parent=5 // pred_region
        %s330 = ssub.s32 %s27, 1
        %s331 = sand.u32 %s54, 1
        %s332 = scalar_lea.sflag [#allocation3], %s331
        %s333 = sand.u32 %s54, 1
        %s334 = smul.addr %s333, 4
        %s335 = scalar_lea.vmem [#allocation2], %s334
        // Predicated region
        $region45: #{tpu_custom_call.1} parent=43 // pred_check
          %p336 = pneg %p67
        $region46: #{tpu_custom_call.1} parent=43 // pred_check_branch
          %338 = sbr.rel (%p336) target = $region48
        $region47: #{tpu_custom_call.1} parent=43 // pred_region
          %339 = dma.done %s332, 64
        $region48: #{tpu_custom_call.1} parent=43 // pred_fallthru
          _
        %s340 = sand.u32 %s32, 1
        %s341 = scalar_lea.sflag [#allocation6], %s340
        %s342 = sand.u32 %s82, 1
        %s343 = smul.addr %s342, 4
        %s344 = scalar_lea.vmem [#allocation5], %s343
        // Predicated region
        $region49: #{tpu_custom_call.1} parent=43 // pred_check
          %p345 = pneg %p95
        $region50: #{tpu_custom_call.1} parent=43 // pred_check_branch
          %347 = sbr.rel (%p345) target = $region52
        $region51: #{tpu_custom_call.1} parent=43 // pred_region
          %348 = dma.done %s341, 64
        $region52: #{tpu_custom_call.1} parent=43 // pred_fallthru
          _
        // Predicated region
        $region53: #{tpu_custom_call.1} parent=43 // pred_check
          %p349 = pneg %p116
        $region54: #{tpu_custom_call.1} parent=43 // pred_check_branch
          %351 = sbr.rel (%p349) target = $region56
        $region55: #{tpu_custom_call.1} parent=43 // pred_region
          %352 = dma.done [#allocation6], 256
        $region56: #{tpu_custom_call.1} parent=43 // pred_fallthru
          _
        // Predicated region
        $region57: #{tpu_custom_call.1} parent=43 // pred_check
          %p353 = pneg %p137
        $region58: #{tpu_custom_call.1} parent=43 // pred_check_branch
          %355 = sbr.rel (%p353) target = $region60
        $region59: #{tpu_custom_call.1} parent=43 // pred_region
          %356 = dma.done [#allocation9], 256
        $region60: #{tpu_custom_call.1} parent=43 // pred_fallthru
          _
        %s357 = sand.u32 %s54, 1
        %s358 = scalar_lea.sflag [#allocation3], %s357
        %s359 = sand.u32 %s54, 1
        %s360 = smul.addr %s359, 4
        %s361 = scalar_lea.vmem [#allocation2], %s360
        %p362 = pneg %p67
        %p363 = pneg %p64
        %s364 = sand.u32 %s32, 1
        %s365 = scalar_lea.sflag [#allocation6], %s364
        %s366 = sand.u32 %s82, 1
        %s367 = smul.addr %s366, 4
        %s368 = scalar_lea.vmem [#allocation5], %s367
        %p369 = pneg %p95
        %p370 = pneg %p92
        %p371 = pneg %p116
        %p372 = pneg %p113
        %p373 = pneg %p137
        %p374 = pneg %p134
        %p375 = pneg %p158
        %p376 = pneg %p155
        %p377 = pneg %p179
        %p378 = pneg %p176
        %p379 = pneg %p207
        %p380 = pneg %p204
        %s381 = sand.u32 %s194, 1
        %s382 = scalar_lea.sflag [#allocation4], %s381
        %s383 = sand.u32 %s194, 1
        %s384 = smul.addr %s383, 4
        %s385 = scalar_lea.vmem [#allocation10], %s384
        %p386 = pneg %p235
        %p387 = pneg %p232
        %s388 = sand.u32 %s222, 1
        %s389 = scalar_lea.sflag [#allocation12], %s388
        %s390 = sand.u32 %s222, 1
        %s391 = smul.addr %s390, 4
        %s392 = scalar_lea.vmem [#allocation11], %s391
        %v394 = vld [vmem:[%s335] sm:$0xf]
        %v395 = vld [vmem:[%s344] sm:$0xf]
        %v396 = vld [vmem:[#allocation7] sm:$0xf]
        %v397 = vld [vmem:[#allocation7 + $0x4] sm:$0xf]
        %v398 = vld [vmem:[#allocation7 + $0x8] sm:$0xf]
        %v399 = vld [vmem:[#allocation7 + $0xc] sm:$0xf]
        %v400 = vld [vmem:[%s4] sm:$0x1]
        %v402 = vlaneseq
        %v403 = vshrl.u32 %v402, 7
        %v404 = vsub.s32 0, %v403
        %v405 = vrot.slane %v400, %v404
        %v411 = vunpack.c.l.b16 %v396
        %v412 = vunpack.c.l.b16 %v397
        %v413 = vunpack.c.l.b16 %v398
        %v414 = vunpack.c.l.b16 %v399
        %v415 = vpack.c.b16 %v412, %v411
        %v416 = vpack.c.b16 %v414, %v413
        %vm419 = vcmask 261120
        %v421 = vsel %vm419, %v394, 0
        %423 = vmatprep.subr.bf16.mxu0 0
        %424 = vmatpush1.bf16.msra.mxu0 %v415
        %425 = vmatprep.subr.bf16.mxu0 0
        %426 = vmatpush1.bf16.msra.mxu0 %v416
        %427 = vmatprep.subr.bf16.mxu0 0
        %428 = vmatpush1.bf16.msra.mxu0 0
        %429 = vmatprep.subr.bf16.mxu0 0
        %430 = vmatpush1.bf16.msra.mxu0 0
        %431 = vmatprep.subr.bf16.mxu0 0
        %432 = vmatpush1.bf16.msra.mxu0 0
        %433 = vmatprep.subr.bf16.mxu0 0
        %434 = vmatpush1.bf16.msra.mxu0 0
        %435 = vmatprep.subr.bf16.mxu0 0
        %436 = vmatpush1.bf16.msra.mxu0 0
        %437 = vmatprep.subr.bf16.mxu0 0
        %438 = vmatpush1.bf16.msra.mxu0 0
        %439 = vmatprep.subr.bf16.mxu0 0
        %440 = vmatpush1.bf16.msra.mxu0 0
        %441 = vmatprep.subr.bf16.mxu0 0
        %442 = vmatpush1.bf16.msra.mxu0 0
        %443 = vmatprep.subr.bf16.mxu0 0
        %444 = vmatpush1.bf16.msra.mxu0 0
        %445 = vmatprep.subr.bf16.mxu0 0
        %446 = vmatpush1.bf16.msra.mxu0 0
        %447 = vmatprep.subr.bf16.mxu0 0
        %448 = vmatpush1.bf16.msra.mxu0 0
        %449 = vmatprep.subr.bf16.mxu0 0
        %450 = vmatpush1.bf16.msra.mxu0 0
        %451 = vmatprep.subr.bf16.mxu0 0
        %452 = vmatpush1.bf16.msra.mxu0 0
        %453 = vmatprep.subr.bf16.mxu0 0
        %454 = vmatpush1.bf16.msra.mxu0 0
        %455 = vmatprep.mubr.bf16.mxu0 0
        %456 = vmatmul.mubr.bf16.gmra.mrb[0].mxu0 %v421
        %v457 = vpop.f32.mrb[0].mxu0
        %v458 = vadd.f32 %v405, %v457
        %v459 = vpop.f32.mrb[0].mxu0
        %v460 = vpop.f32.mrb[0].mxu0
        %v461 = vpop.f32.mrb[0].mxu0
        %462 = vdwg.mxu0
        %v463 = vpack.c.bf16 %v458, %v458
        %vm464 = vcmask 257024
        %465 = vst.msk [vmem:[%s385] sm:$0xf] %vm464, %v463
        %v466 = vld [vmem:[#allocation8] sm:$0xf]
        %v467 = vld [vmem:[#allocation8 + $0x4] sm:$0xf]
        %v468 = vld [vmem:[#allocation8 + $0x8] sm:$0xf]
        %v469 = vld [vmem:[#allocation8 + $0xc] sm:$0xf]
        %v470 = vld [vmem:[%s5] sm:$0x1]
        %v472 = vlaneseq
        %v473 = vshrl.u32 %v472, 7
        %v474 = vsub.s32 0, %v473
        %v475 = vrot.slane %v470, %v474
        %v481 = vunpack.c.l.b16 %v466
        %v482 = vunpack.c.l.b16 %v467
        %v483 = vunpack.c.l.b16 %v468
        %v484 = vunpack.c.l.b16 %v469
        %v485 = vpack.c.b16 %v482, %v481
        %v486 = vpack.c.b16 %v484, %v483
        %v490 = vsel %vm419, %v395, 0
        %492 = vmatprep.subr.bf16.mxu0 0
        %493 = vmatpush1.bf16.msra.mxu0 %v485
        %494 = vmatprep.subr.bf16.mxu0 0
        %495 = vmatpush1.bf16.msra.mxu0 %v486
        %496 = vmatprep.subr.bf16.mxu0 0
        %497 = vmatpush1.bf16.msra.mxu0 0
        %498 = vmatprep.subr.bf16.mxu0 0
        %499 = vmatpush1.bf16.msra.mxu0 0
        %500 = vmatprep.subr.bf16.mxu0 0
        %501 = vmatpush1.bf16.msra.mxu0 0
        %502 = vmatprep.subr.bf16.mxu0 0
        %503 = vmatpush1.bf16.msra.mxu0 0
        %504 = vmatprep.subr.bf16.mxu0 0
        %505 = vmatpush1.bf16.msra.mxu0 0
        %506 = vmatprep.subr.bf16.mxu0 0
        %507 = vmatpush1.bf16.msra.mxu0 0
        %508 = vmatprep.subr.bf16.mxu0 0
        %509 = vmatpush1.bf16.msra.mxu0 0
        %510 = vmatprep.subr.bf16.mxu0 0
        %511 = vmatpush1.bf16.msra.mxu0 0
        %512 = vmatprep.subr.bf16.mxu0 0
        %513 = vmatpush1.bf16.msra.mxu0 0
        %514 = vmatprep.subr.bf16.mxu0 0
        %515 = vmatpush1.bf16.msra.mxu0 0
        %516 = vmatprep.subr.bf16.mxu0 0
        %517 = vmatpush1.bf16.msra.mxu0 0
        %518 = vmatprep.subr.bf16.mxu0 0
        %519 = vmatpush1.bf16.msra.mxu0 0
        %520 = vmatprep.subr.bf16.mxu0 0
        %521 = vmatpush1.bf16.msra.mxu0 0
        %522 = vmatprep.subr.bf16.mxu0 0
        %523 = vmatpush1.bf16.msra.mxu0 0
        %524 = vmatprep.mubr.bf16.mxu0 0
        %525 = vmatmul.mubr.bf16.gmra.mrb[0].mxu0 %v490
        %v526 = vpop.f32.mrb[0].mxu0
        %v527 = vadd.f32 %v475, %v526
        %v528 = vpop.f32.mrb[0].mxu0
        %v529 = vpop.f32.mrb[0].mxu0
        %v530 = vpop.f32.mrb[0].mxu0
        %531 = vdwg.mxu0
        %v532 = vpack.c.bf16 %v527, %v527
        %533 = vst.msk [vmem:[%s392] sm:$0xf] %vm464, %v532
        %s534 = sand.u32 %s194, 1
        %s535 = scalar_lea.sflag [#allocation4], %s534
        %s536 = sand.u32 %s194, 1
        %s537 = smul.addr %s536, 4
        %s538 = scalar_lea.vmem [#allocation10], %s537
        %s539 = sand.u32 %s222, 1
        %s540 = scalar_lea.sflag [#allocation12], %s539
        %s541 = sand.u32 %s222, 1
        %s542 = smul.addr %s541, 4
        %s543 = scalar_lea.vmem [#allocation11], %s542
        // Predicated region
        $region61: #{tpu_custom_call.1} parent=43 // pred_check
          %p544 = pneg %p204
        $region62: #{tpu_custom_call.1} parent=43 // pred_check_branch
          %546 = sbr.rel (%p544) target = $region64
        $region63: #{tpu_custom_call.1} parent=43 // pred_region
          %s548 = ssub.s32 64, 64
          %549 = vsyncadd %s535, %s548
          %s550 = sadd.s32 %s37, %s36
          %s551 = smul.addr %s550, 64
          %s552 = scalar_lea.hbm %s6, %s551
          %s554 = sshll.u32 %s538, 4
          %s555 = int_to_ptr.vmem [resolvable:$true] %s554
          %557 = dma.vmem_to_hbm [thread:$0]  %s555, 64, %s552, %s535
        $region64: #{tpu_custom_call.1} parent=43 // pred_fallthru
          _
        // Predicated region
        $region65: #{tpu_custom_call.1} parent=43 // pred_check
          %p558 = pneg %p232
        $region66: #{tpu_custom_call.1} parent=43 // pred_check_branch
          %560 = sbr.rel (%p558) target = $region68
        $region67: #{tpu_custom_call.1} parent=43 // pred_region
          %s562 = ssub.s32 64, 64
          %563 = vsyncadd %s540, %s562
          %s564 = sadd.s32 %s37, %s36
          %s565 = smul.addr %s564, 64
          %s566 = scalar_lea.hbm %s7, %s565
          %s568 = sshll.u32 %s543, 4
          %s569 = int_to_ptr.vmem [resolvable:$true] %s568
          %571 = dma.vmem_to_hbm [thread:$0]  %s569, 64, %s566, %s540
        $region68: #{tpu_custom_call.1} parent=43 // pred_fallthru
          _
      $region44: #{tpu_custom_call.1} parent=5 // pred_fallthru
        _
      %p572 = scmp.le.s32.totalorder 2, %s27
      // Predicated region
      $region69: #{tpu_custom_call.1} parent=5 // pred_check
        %p573 = pneg %p572
      $region70: #{tpu_custom_call.1} parent=5 // pred_check_branch
        %575 = sbr.rel (%p573) target = $region72
      $region71: #{tpu_custom_call.1} parent=5 // pred_region
        %s576 = ssub.s32 %s27, 2
        // Predicated region
        $region73: #{tpu_custom_call.1} parent=71 // pred_check
          %p577 = pneg %p210
        $region74: #{tpu_custom_call.1} parent=71 // pred_check_branch
          %579 = sbr.rel (%p577) target = $region76
        $region75: #{tpu_custom_call.1} parent=71 // pred_region
          %s580 = sand.u32 %s195, 1
          %s581 = scalar_lea.sflag [#allocation4], %s580
          %s582 = sand.u32 %s195, 1
          %s583 = smul.addr %s582, 4
          %s584 = scalar_lea.vmem [#allocation10], %s583
          %585 = dma.done %s581, 64
        $region76: #{tpu_custom_call.1} parent=71 // pred_fallthru
          _
        // Predicated region
        $region77: #{tpu_custom_call.1} parent=71 // pred_check
          %p586 = pneg %p238
        $region78: #{tpu_custom_call.1} parent=71 // pred_check_branch
          %588 = sbr.rel (%p586) target = $region80
        $region79: #{tpu_custom_call.1} parent=71 // pred_region
          %s589 = sand.u32 %s223, 1
          %s590 = scalar_lea.sflag [#allocation12], %s589
          %s591 = sand.u32 %s223, 1
          %s592 = smul.addr %s591, 4
          %s593 = scalar_lea.vmem [#allocation11], %s592
          %594 = dma.done %s590, 64
        $region80: #{tpu_custom_call.1} parent=71 // pred_fallthru
          _
      $region72: #{tpu_custom_call.1} parent=5 // pred_fallthru
        _
    $region6: #{tpu_custom_call.1} parent=1 // loop_footer
      %s31 = sadd.s32 1, %s27
    $region7: #{tpu_custom_call.1} parent=1 // loop_footer_branch
      %26 = sbr.rel target = $region3
    $region8: #{tpu_custom_call.1} parent=1 // loop_exit
      _
    %595 = vsyncpa [#allocation3], 1
    %s596 = scalar_lea.sflag [#allocation3], 1
    %597 = vsyncpa %s596, 1
    %598 = vsyncpa [#allocation6], 1
    %s599 = scalar_lea.sflag [#allocation6], 1
    %600 = vsyncpa %s599, 1
    %601 = vsyncpa [#allocation9], 1
    %602 = vsyncpa [#allocation4], 1
    %s603 = scalar_lea.sflag [#allocation4], 1
    %604 = vsyncpa %s603, 1
    %605 = vsyncpa [#allocation12], 1
    %s606 = scalar_lea.sflag [#allocation12], 1
    %607 = vsyncpa %s606, 1

// kernel: tpu_custom_call.1
$region0: #{tpu_custom_call.1}
  #allocation0 [shape = 'u32[]', space=smem, size = 0x4, offset = 0x4, fixed_abs, tag = 'smem constant byte address 0x4 - core index']
  #allocation1 [shape = 'u32[144,128]{1,0:T(1,128)}', space=vmem, size = 0x12000, scoped, tag = 'internal scratch']
  %s0 = inlined_call_operand.hbm [shape: bf16[2,8,32], index: 0, kind: input, shape index: {}]
  %s1 = inlined_call_operand.hbm [shape: bf16[2,8,32], index: 1, kind: input, shape index: {}]
  %s2 = inlined_call_operand.hbm [shape: bf16[32,32], index: 2, kind: input, shape index: {}]
  %s3 = inlined_call_operand.hbm [shape: bf16[32,32], index: 3, kind: input, shape index: {}]
  %s4 = inlined_call_operand.vmem [shape: f32[1,32], index: 4, kind: input, shape index: {}]
  %s5 = inlined_call_operand.vmem [shape: f32[1,32], index: 5, kind: input, shape index: {}]
  %s6 = inlined_call_operand.hbm [shape: bf16[2,8,32], index: 6, kind: output, shape index: {0}]
  %s7 = inlined_call_operand.hbm [shape: bf16[2,8,32], index: 7, kind: output, shape index: {1}]
  %8 = xla_tuple %s6, %s7
  %s9 = sld [smem:[#allocation0]]
  $region81: #{tpu_custom_call.1} parent=0
    _
  %s11 = ssub.s32 1, %s9
  %s12 = scalar_select 0, %s11, %s9
  $region1: #{tpu_custom_call.1} parent=0
    #allocation2 [shape = 'u8[4096]{0}', space=vmem, size = 0x1000, scoped, tag = 'input window, operand 0']
    #allocation3 [shape = 's32[2]{0}', space=sflag, size = 0x8, scoped, tag = 'scoped memory for tpu_custom_call.1']
    #allocation4 [shape = 's32[2]{0}', space=sflag, size = 0x8, scoped, tag = 'scoped memory for tpu_custom_call.1']
    #allocation5 [shape = 'u8[4096]{0}', space=vmem, size = 0x1000, scoped, tag = 'input window, operand 1']
    #allocation6 [shape = 's32[2]{0}', space=sflag, size = 0x8, scoped, tag = 'scoped memory for tpu_custom_call.1']
    #allocation7 [shape = 'u8[8192]{0}', space=vmem, size = 0x2000, scoped, tag = 'input window, operand 2, single buffered']
    #allocation8 [shape = 'u8[8192]{0}', space=vmem, size = 0x2000, scoped, tag = 'input window, operand 3, single buffered']
    #allocation9 [shape = 's32[1]{0}', space=sflag, size = 0x4, scoped, tag = 'scoped memory for tpu_custom_call.1']
    #allocation10 [shape = 'u8[4096]{0}', space=vmem, size = 0x1000, scoped, tag = 'output window, operand 0']
    #allocation11 [shape = 'u8[4096]{0}', space=vmem, size = 0x1000, scoped, tag = 'output window, operand 1']
    #allocation12 [shape = 's32[2]{0}', space=sflag, size = 0x8, scoped, tag = 'scoped memory for tpu_custom_call.1']
    %13 = vsyncpa [#allocation3], 0
    %s14 = scalar_lea.sflag [#allocation3], 1
    %15 = vsyncpa %s14, 0
    %16 = vsyncpa [#allocation6], 0
    %s17 = scalar_lea.sflag [#allocation6], 1
    %18 = vsyncpa %s17, 0
    %19 = vsyncpa [#allocation9], 0
    %20 = vsyncpa [#allocation4], 0
    %s21 = scalar_lea.sflag [#allocation4], 1
    %22 = vsyncpa %s21, 0
    %23 = vsyncpa [#allocation12], 0
    %s24 = scalar_lea.sflag [#allocation12], 1
    %25 = vsyncpa %s24, 0
    loop: start=0, step=1, limit=4
    $region2: #{tpu_custom_call.1} parent=1 // loop_pre_header
      _
    $region3: #{tpu_custom_call.1} parent=1 // loop_header
      %s27 = sphi 0, %s31
      %p28 = scmp.ge.s32.totalorder %s27, 4
      %s34 = sphi 0, %s46
      %s35 = sphi 0, %s42
      %s36 = sphi 0, %s34
      %s37 = sphi 0, %s35
      %s38 = sphi 0, %s36
      %s39 = sphi 0, %s37
      %s51 = sphi 0, %s53
      %s54 = sphi 0, %s51
      %s55 = sphi 0, %s54
      %s71 = sphi 0, %s55
      %s79 = sphi 0, %s81
      %s82 = sphi 0, %s79
      %s83 = sphi 0, %s82
      %s99 = sphi 0, %s83
      %s103 = sphi 0, %s103
      %s105 = sphi 0, %s103
      %s106 = sphi 0, %s105
      %s120 = sphi 0, %s106
      %s124 = sphi 0, %s124
      %s126 = sphi 0, %s124
      %s127 = sphi 0, %s126
      %s141 = sphi 0, %s127
      %s145 = sphi 0, %s145
      %s147 = sphi 0, %s145
      %s148 = sphi 0, %s147
      %s162 = sphi 0, %s148
      %s166 = sphi 0, %s166
      %s168 = sphi 0, %s166
      %s169 = sphi 0, %s168
      %s183 = sphi 0, %s169
      %s191 = sphi 0, %s193
      %s194 = sphi 0, %s191
      %s195 = sphi 0, %s194
      %s211 = sphi 0, %s195
      %s219 = sphi 0, %s221
      %s222 = sphi 0, %s219
      %s223 = sphi 0, %s222
      %s239 = sphi 0, %s223
    $region4: #{tpu_custom_call.1} parent=1 // loop_header_branch
      %30 = sbr.rel (%p28) target = $region8
    $region5: #{tpu_custom_call.1} parent=1 // loop_body
      %s32 = ssub.s32 %s27, 1
      %s33 = ssub.s32 %s27, 2
      %s40 = sadd.s32 1, %s35
      %p41 = scmp.ge.s32.totalorder %s40, 1
      %s42 = scalar_select %p41, 0, %s40
      %s43 = sadd.s32 1, %s34
      %s44 = scalar_select %p41, %s43, %s34
      %p45 = scmp.ge.s32.totalorder %s44, 2
      %s46 = scalar_select %p45, 0, %s44
      %s47 = ssub.s32 %s34, %s46
      %s48 = ssub.s32 %s35, %s42
      %s49 = sor.u32 %s47, %s48
      %p50 = scmp.eq.s32.totalorder %s49, 0
      %s52 = sadd.s32 %s51, 1
      %s53 = scalar_select %p50, %s51, %s52
      %p56 = pneg %p50
      %p57 = scmp.eq.s32.totalorder %s27, 1
      %p58 = por %p56, %p57
      %p59 = scmp.ne.s32.totalorder %s51, %s54
      %p60 = scmp.eq.s32.totalorder %s27, 0
      %p61 = por %p59, %p60
      %p62 = scmp.ne.s32.totalorder %s51, %s54
      %p63 = scmp.eq.s32.totalorder %s32, 1
      %p64 = por %p62, %p63
      %p65 = scmp.ne.s32.totalorder %s54, %s55
      %p66 = scmp.eq.s32.totalorder %s32, 0
      %p67 = por %p65, %p66
      %p68 = scmp.ne.s32.totalorder %s54, %s55
      %p69 = scmp.eq.s32.totalorder %s33, 1
      %p70 = por %p68, %p69
      %p72 = scmp.ne.s32.totalorder %s55, %s71
      %p73 = scmp.eq.s32.totalorder %s33, 0
      %p74 = por %p72, %p73
      %s75 = ssub.s32 %s34, %s46
      %s76 = ssub.s32 %s35, %s42
      %s77 = sor.u32 %s75, %s76
      %p78 = scmp.eq.s32.totalorder %s77, 0
      %s80 = sadd.s32 %s79, 1
      %s81 = scalar_select %p78, %s79, %s80
      %p84 = pneg %p78
      %p85 = scmp.eq.s32.totalorder %s27, 1
      %p86 = por %p84, %p85
      %p87 = scmp.ne.s32.totalorder %s79, %s82
      %p88 = scmp.eq.s32.totalorder %s27, 0
      %p89 = por %p87, %p88
      %p90 = scmp.ne.s32.totalorder %s79, %s82
      %p91 = scmp.eq.s32.totalorder %s32, 1
      %p92 = por %p90, %p91
      %p93 = scmp.ne.s32.totalorder %s82, %s83
      %p94 = scmp.eq.s32.totalorder %s32, 0
      %p95 = por %p93, %p94
      %p96 = scmp.ne.s32.totalorder %s82, %s83
      %p97 = scmp.eq.s32.totalorder %s33, 1
      %p98 = por %p96, %p97
      %p100 = scmp.ne.s32.totalorder %s83, %s99
      %p101 = scmp.eq.s32.totalorder %s33, 0
      %p102 = por %p100, %p101
      %s104 = sadd.s32 %s103, 1
      %p107 = scmp.eq.s32.totalorder %s27, 1
      %p108 = scmp.ne.s32.totalorder %s103, %s105
      %p109 = scmp.eq.s32.totalorder %s27, 0
      %p110 = por %p108, %p109
      %p111 = scmp.ne.s32.totalorder %s103, %s105
      %p112 = scmp.eq.s32.totalorder %s32, 1
      %p113 = por %p111, %p112
      %p114 = scmp.ne.s32.totalorder %s105, %s106
      %p115 = scmp.eq.s32.totalorder %s32, 0
      %p116 = por %p114, %p115
      %p117 = scmp.ne.s32.totalorder %s105, %s106
      %p118 = scmp.eq.s32.totalorder %s33, 1
      %p119 = por %p117, %p118
      %p121 = scmp.ne.s32.totalorder %s106, %s120
      %p122 = scmp.eq.s32.totalorder %s33, 0
      %p123 = por %p121, %p122
      %s125 = sadd.s32 %s124, 1
      %p128 = scmp.eq.s32.totalorder %s27, 1
      %p129 = scmp.ne.s32.totalorder %s124, %s126
      %p130 = scmp.eq.s32.totalorder %s27, 0
      %p131 = por %p129, %p130
      %p132 = scmp.ne.s32.totalorder %s124, %s126
      %p133 = scmp.eq.s32.totalorder %s32, 1
      %p134 = por %p132, %p133
      %p135 = scmp.ne.s32.totalorder %s126, %s127
      %p136 = scmp.eq.s32.totalorder %s32, 0
      %p137 = por %p135, %p136
      %p138 = scmp.ne.s32.totalorder %s126, %s127
      %p139 = scmp.eq.s32.totalorder %s33, 1
      %p140 = por %p138, %p139
      %p142 = scmp.ne.s32.totalorder %s127, %s141
      %p143 = scmp.eq.s32.totalorder %s33, 0
      %p144 = por %p142, %p143
      %s146 = sadd.s32 %s145, 1
      %p149 = scmp.eq.s32.totalorder %s27, 1
      %p150 = scmp.ne.s32.totalorder %s145, %s147
      %p151 = scmp.eq.s32.totalorder %s27, 0
      %p152 = por %p150, %p151
      %p153 = scmp.ne.s32.totalorder %s145, %s147
      %p154 = scmp.eq.s32.totalorder %s32, 1
      %p155 = por %p153, %p154
      %p156 = scmp.ne.s32.totalorder %s147, %s148
      %p157 = scmp.eq.s32.totalorder %s32, 0
      %p158 = por %p156, %p157
      %p159 = scmp.ne.s32.totalorder %s147, %s148
      %p160 = scmp.eq.s32.totalorder %s33, 1
      %p161 = por %p159, %p160
      %p163 = scmp.ne.s32.totalorder %s148, %s162
      %p164 = scmp.eq.s32.totalorder %s33, 0
      %p165 = por %p163, %p164
      %s167 = sadd.s32 %s166, 1
      %p170 = scmp.eq.s32.totalorder %s27, 1
      %p171 = scmp.ne.s32.totalorder %s166, %s168
      %p172 = scmp.eq.s32.totalorder %s27, 0
      %p173 = por %p171, %p172
      %p174 = scmp.ne.s32.totalorder %s166, %s168
      %p175 = scmp.eq.s32.totalorder %s32, 1
      %p176 = por %p174, %p175
      %p177 = scmp.ne.s32.totalorder %s168, %s169
      %p178 = scmp.eq.s32.totalorder %s32, 0
      %p179 = por %p177, %p178
      %p180 = scmp.ne.s32.totalorder %s168, %s169
      %p181 = scmp.eq.s32.totalorder %s33, 1
      %p182 = por %p180, %p181
      %p184 = scmp.ne.s32.totalorder %s169, %s183
      %p185 = scmp.eq.s32.totalorder %s33, 0
      %p186 = por %p184, %p185
      %s187 = ssub.s32 %s34, %s46
      %s188 = ssub.s32 %s35, %s42
      %s189 = sor.u32 %s187, %s188
      %p190 = scmp.eq.s32.totalorder %s189, 0
      %s192 = sadd.s32 %s191, 1
      %s193 = scalar_select %p190, %s191, %s192
      %p196 = pneg %p190
      %p197 = scmp.eq.s32.totalorder %s27, 1
      %p198 = por %p196, %p197
      %p199 = scmp.ne.s32.totalorder %s191, %s194
      %p200 = scmp.eq.s32.totalorder %s27, 0
      %p201 = por %p199, %p200
      %p202 = scmp.ne.s32.totalorder %s191, %s194
      %p203 = scmp.eq.s32.totalorder %s32, 1
      %p204 = por %p202, %p203
      %p205 = scmp.ne.s32.totalorder %s194, %s195
      %p206 = scmp.eq.s32.totalorder %s32, 0
      %p207 = por %p205, %p206
      %p208 = scmp.ne.s32.totalorder %s194, %s195
      %p209 = scmp.eq.s32.totalorder %s33, 1
      %p210 = por %p208, %p209
      %p212 = scmp.ne.s32.totalorder %s195, %s211
      %p213 = scmp.eq.s32.totalorder %s33, 0
      %p214 = por %p212, %p213
      %s215 = ssub.s32 %s34, %s46
      %s216 = ssub.s32 %s35, %s42
      %s217 = sor.u32 %s215, %s216
      %p218 = scmp.eq.s32.totalorder %s217, 0
      %s220 = sadd.s32 %s219, 1
      %s221 = scalar_select %p218, %s219, %s220
      %p224 = pneg %p218
      %p225 = scmp.eq.s32.totalorder %s27, 1
      %p226 = por %p224, %p225
      %p227 = scmp.ne.s32.totalorder %s219, %s222
      %p228 = scmp.eq.s32.totalorder %s27, 0
      %p229 = por %p227, %p228
      %p230 = scmp.ne.s32.totalorder %s219, %s222
      %p231 = scmp.eq.s32.totalorder %s32, 1
      %p232 = por %p230, %p231
      %p233 = scmp.ne.s32.totalorder %s222, %s223
      %p234 = scmp.eq.s32.totalorder %s32, 0
      %p235 = por %p233, %p234
      %p236 = scmp.ne.s32.totalorder %s222, %s223
      %p237 = scmp.eq.s32.totalorder %s33, 1
      %p238 = por %p236, %p237
      %p240 = scmp.ne.s32.totalorder %s223, %s239
      %p241 = scmp.eq.s32.totalorder %s33, 0
      %p242 = por %p240, %p241
      %p243 = scmp.le.s32.totalorder 1, %s27
      %p244 = scmp.lt.s32.totalorder %s27, 3
      %p245 = pnand %p243, %p244
      %p246 = pneg %p245
      // Predicated region
      $region9: #{tpu_custom_call.1} parent=5 // pred_check
        _
      $region10: #{tpu_custom_call.1} parent=5 // pred_check_branch
        %248 = sbr.rel (%p245) target = $region12
      $region11: #{tpu_custom_call.1} parent=5 // pred_region
        %s249 = ssub.s32 %s27, 1
        // Predicated region
        $region13: #{tpu_custom_call.1} parent=11 // pred_check
          %p250 = pneg %p116
        $region14: #{tpu_custom_call.1} parent=11 // pred_check_branch
          %252 = sbr.rel (%p250) target = $region16
        $region15: #{tpu_custom_call.1} parent=11 // pred_region
          %s254 = ssub.s32 256, 256
          %255 = vsyncadd [#allocation6], %s254
          %s256 = sshll.u32 [#allocation7], 4
          %s257 = int_to_ptr.vmem [resolvable:$true] %s256
          %262 = dma.hbm_to_vmem [thread:$0]  %s2, 256, %s257, [#allocation6], 64, 64, 4
        $region16: #{tpu_custom_call.1} parent=11 // pred_fallthru
          _
        // Predicated region
        $region17: #{tpu_custom_call.1} parent=11 // pred_check
          %p263 = pneg %p137
        $region18: #{tpu_custom_call.1} parent=11 // pred_check_branch
          %265 = sbr.rel (%p263) target = $region20
        $region19: #{tpu_custom_call.1} parent=11 // pred_region
          %s267 = ssub.s32 256, 256
          %268 = vsyncadd [#allocation9], %s267
          %s269 = sshll.u32 [#allocation8], 4
          %s270 = int_to_ptr.vmem [resolvable:$true] %s269
          %275 = dma.hbm_to_vmem [thread:$0]  %s3, 256, %s270, [#allocation9], 64, 64, 4
        $region20: #{tpu_custom_call.1} parent=11 // pred_fallthru
          _
        // Predicated region
        $region21: #{tpu_custom_call.1} parent=11 // pred_check
          %p276 = pneg %p158
        $region22: #{tpu_custom_call.1} parent=11 // pred_check_branch
          %278 = sbr.rel (%p276) target = $region24
        $region23: #{tpu_custom_call.1} parent=11 // pred_region
          _
        $region24: #{tpu_custom_call.1} parent=11 // pred_fallthru
          _
        // Predicated region
        $region25: #{tpu_custom_call.1} parent=11 // pred_check
          %p279 = pneg %p179
        $region26: #{tpu_custom_call.1} parent=11 // pred_check_branch
          %281 = sbr.rel (%p279) target = $region28
        $region27: #{tpu_custom_call.1} parent=11 // pred_region
          _
        $region28: #{tpu_custom_call.1} parent=11 // pred_fallthru
          _
      $region12: #{tpu_custom_call.1} parent=5 // pred_fallthru
        _
      %p282 = scmp.lt.s32.totalorder %s27, 2
      // Predicated region
      $region29: #{tpu_custom_call.1} parent=5 // pred_check
        %p283 = pneg %p282
      $region30: #{tpu_custom_call.1} parent=5 // pred_check_branch
        %285 = sbr.rel (%p283) target = $region32
      $region31: #{tpu_custom_call.1} parent=5 // pred_region
        // Predicated region
        $region33: #{tpu_custom_call.1} parent=31 // pred_check
          %p286 = pneg %p61
        $region34: #{tpu_custom_call.1} parent=31 // pred_check_branch
          %288 = sbr.rel (%p286) target = $region36
        $region35: #{tpu_custom_call.1} parent=31 // pred_region
          %s289 = sand.u32 %s51, 1
          %s290 = scalar_lea.sflag [#allocation3], %s289
          %s291 = sand.u32 %s51, 1
          %s292 = smul.addr %s291, 4
          %s293 = scalar_lea.vmem [#allocation2], %s292
          %s295 = ssub.s32 64, 64
          %296 = vsyncadd %s290, %s295
          %s297 = sadd.s32 %s35, %s34
          %s298 = smul.addr %s297, 64
          %s299 = scalar_lea.hbm %s0, %s298
          %s301 = sshll.u32 %s293, 4
          %s302 = int_to_ptr.vmem [resolvable:$true] %s301
          %304 = dma.hbm_to_vmem [thread:$0]  %s299, 64, %s302, %s290
        $region36: #{tpu_custom_call.1} parent=31 // pred_fallthru
          _
        // Predicated region
        $region37: #{tpu_custom_call.1} parent=31 // pred_check
          %p305 = pneg %p89
        $region38: #{tpu_custom_call.1} parent=31 // pred_check_branch
          %307 = sbr.rel (%p305) target = $region40
        $region39: #{tpu_custom_call.1} parent=31 // pred_region
          %s308 = sand.u32 %s27, 1
          %s309 = scalar_lea.sflag [#allocation6], %s308
          %s310 = sand.u32 %s79, 1
          %s311 = smul.addr %s310, 4
          %s312 = scalar_lea.vmem [#allocation5], %s311
          %s314 = ssub.s32 64, 64
          %315 = vsyncadd %s309, %s314
          %s316 = sadd.s32 %s35, %s34
          %s317 = smul.addr %s316, 64
          %s318 = scalar_lea.hbm %s1, %s317
          %s320 = sshll.u32 %s312, 4
          %s321 = int_to_ptr.vmem [resolvable:$true] %s320
          %323 = dma.hbm_to_vmem [thread:$0]  %s318, 64, %s321, %s309
        $region40: #{tpu_custom_call.1} parent=31 // pred_fallthru
          _
      $region32: #{tpu_custom_call.1} parent=5 // pred_fallthru
        _
      %p324 = scmp.le.s32.totalorder 1, %s27
      %p325 = scmp.lt.s32.totalorder %s27, 3
      %p326 = pnand %p324, %p325
      %p327 = pneg %p326
      // Predicated region
      $region41: #{tpu_custom_call.1} parent=5 // pred_check
        _
      $region42: #{tpu_custom_call.1} parent=5 // pred_check_branch
        %329 = sbr.rel (%p326) target = $region44
      $region43: #{tpu_custom_call.1} parent=5 // pred_region
        %s330 = ssub.s32 %s27, 1
        %s331 = sand.u32 %s54, 1
        %s332 = scalar_lea.sflag [#allocation3], %s331
        %s333 = sand.u32 %s54, 1
        %s334 = smul.addr %s333, 4
        %s335 = scalar_lea.vmem [#allocation2], %s334
        // Predicated region
        $region45: #{tpu_custom_call.1} parent=43 // pred_check
          %p336 = pneg %p67
        $region46: #{tpu_custom_call.1} parent=43 // pred_check_branch
          %338 = sbr.rel (%p336) target = $region48
        $region47: #{tpu_custom_call.1} parent=43 // pred_region
          %339 = dma.done %s332, 64
        $region48: #{tpu_custom_call.1} parent=43 // pred_fallthru
          _
        %s340 = sand.u32 %s32, 1
        %s341 = scalar_lea.sflag [#allocation6], %s340
        %s342 = sand.u32 %s82, 1
        %s343 = smul.addr %s342, 4
        %s344 = scalar_lea.vmem [#allocation5], %s343
        // Predicated region
        $region49: #{tpu_custom_call.1} parent=43 // pred_check
          %p345 = pneg %p95
        $region50: #{tpu_custom_call.1} parent=43 // pred_check_branch
          %347 = sbr.rel (%p345) target = $region52
        $region51: #{tpu_custom_call.1} parent=43 // pred_region
          %348 = dma.done %s341, 64
        $region52: #{tpu_custom_call.1} parent=43 // pred_fallthru
          _
        // Predicated region
        $region53: #{tpu_custom_call.1} parent=43 // pred_check
          %p349 = pneg %p116
        $region54: #{tpu_custom_call.1} parent=43 // pred_check_branch
          %351 = sbr.rel (%p349) target = $region56
        $region55: #{tpu_custom_call.1} parent=43 // pred_region
          %352 = dma.done [#allocation6], 256
        $region56: #{tpu_custom_call.1} parent=43 // pred_fallthru
          _
        // Predicated region
        $region57: #{tpu_custom_call.1} parent=43 // pred_check
          %p353 = pneg %p137
        $region58: #{tpu_custom_call.1} parent=43 // pred_check_branch
          %355 = sbr.rel (%p353) target = $region60
        $region59: #{tpu_custom_call.1} parent=43 // pred_region
          %356 = dma.done [#allocation9], 256
        $region60: #{tpu_custom_call.1} parent=43 // pred_fallthru
          _
        %s357 = sand.u32 %s54, 1
        %s358 = scalar_lea.sflag [#allocation3], %s357
        %s359 = sand.u32 %s54, 1
        %s360 = smul.addr %s359, 4
        %s361 = scalar_lea.vmem [#allocation2], %s360
        %p362 = pneg %p67
        %p363 = pneg %p64
        %s364 = sand.u32 %s32, 1
        %s365 = scalar_lea.sflag [#allocation6], %s364
        %s366 = sand.u32 %s82, 1
        %s367 = smul.addr %s366, 4
        %s368 = scalar_lea.vmem [#allocation5], %s367
        %p369 = pneg %p95
        %p370 = pneg %p92
        %p371 = pneg %p116
        %p372 = pneg %p113
        %p373 = pneg %p137
        %p374 = pneg %p134
        %p375 = pneg %p158
        %p376 = pneg %p155
        %p377 = pneg %p179
        %p378 = pneg %p176
        %p379 = pneg %p207
        %p380 = pneg %p204
        %s381 = sand.u32 %s194, 1
        %s382 = scalar_lea.sflag [#allocation4], %s381
        %s383 = sand.u32 %s194, 1
        %s384 = smul.addr %s383, 4
        %s385 = scalar_lea.vmem [#allocation10], %s384
        %p386 = pneg %p235
        %p387 = pneg %p232
        %s388 = sand.u32 %s222, 1
        %s389 = scalar_lea.sflag [#allocation12], %s388
        %s390 = sand.u32 %s222, 1
        %s391 = smul.addr %s390, 4
        %s392 = scalar_lea.vmem [#allocation11], %s391
        %v394 = vld [vmem:[%s335] sm:$0xf]
        %v395 = vld [vmem:[%s344] sm:$0xf]
        %v396 = vld [vmem:[#allocation7] sm:$0xf]
        %v397 = vld [vmem:[#allocation7 + $0x4] sm:$0xf]
        %v398 = vld [vmem:[#allocation7 + $0x8] sm:$0xf]
        %v399 = vld [vmem:[#allocation7 + $0xc] sm:$0xf]
        %v400 = vld [vmem:[%s4] sm:$0x1]
        %v402 = vlaneseq
        %v403 = vshrl.u32 %v402, 7
        %v404 = vsub.s32 0, %v403
        %v405 = vrot.slane %v400, %v404
        %v411 = vunpack.c.l.b16 %v396
        %v412 = vunpack.c.l.b16 %v397
        %v413 = vunpack.c.l.b16 %v398
        %v414 = vunpack.c.l.b16 %v399
        %v415 = vpack.c.b16 %v412, %v411
        %v416 = vpack.c.b16 %v414, %v413
        %vm419 = vcmask 261120
        %v421 = vsel %vm419, %v394, 0
        %423 = vmatprep.subr.bf16.mxu0 0
        %424 = vmatpush1.bf16.msra.mxu0 %v415
        %425 = vmatprep.subr.bf16.mxu0 0
        %426 = vmatpush1.bf16.msra.mxu0 %v416
        %427 = vmatprep.subr.bf16.mxu0 0
        %428 = vmatpush1.bf16.msra.mxu0 0
        %429 = vmatprep.subr.bf16.mxu0 0
        %430 = vmatpush1.bf16.msra.mxu0 0
        %431 = vmatprep.subr.bf16.mxu0 0
        %432 = vmatpush1.bf16.msra.mxu0 0
        %433 = vmatprep.subr.bf16.mxu0 0
        %434 = vmatpush1.bf16.msra.mxu0 0
        %435 = vmatprep.subr.bf16.mxu0 0
        %436 = vmatpush1.bf16.msra.mxu0 0
        %437 = vmatprep.subr.bf16.mxu0 0
        %438 = vmatpush1.bf16.msra.mxu0 0
        %439 = vmatprep.subr.bf16.mxu0 0
        %440 = vmatpush1.bf16.msra.mxu0 0
        %441 = vmatprep.subr.bf16.mxu0 0
        %442 = vmatpush1.bf16.msra.mxu0 0
        %443 = vmatprep.subr.bf16.mxu0 0
        %444 = vmatpush1.bf16.msra.mxu0 0
        %445 = vmatprep.subr.bf16.mxu0 0
        %446 = vmatpush1.bf16.msra.mxu0 0
        %447 = vmatprep.subr.bf16.mxu0 0
        %448 = vmatpush1.bf16.msra.mxu0 0
        %449 = vmatprep.subr.bf16.mxu0 0
        %450 = vmatpush1.bf16.msra.mxu0 0
        %451 = vmatprep.subr.bf16.mxu0 0
        %452 = vmatpush1.bf16.msra.mxu0 0
        %453 = vmatprep.subr.bf16.mxu0 0
        %454 = vmatpush1.bf16.msra.mxu0 0
        %455 = vmatprep.mubr.bf16.mxu0 0
        %456 = vmatmul.mubr.bf16.gmra.mrb[0].mxu0 %v421
        %v457 = vpop.f32.mrb[0].mxu0
        %v458 = vadd.f32 %v405, %v457
        %v459 = vpop.f32.mrb[0].mxu0
        %v460 = vpop.f32.mrb[0].mxu0
        %v461 = vpop.f32.mrb[0].mxu0
        %462 = vdwg.mxu0
        %v463 = vpack.c.bf16 %v458, %v458
        %vm464 = vcmask 257024
        %465 = vst.msk [vmem:[%s385] sm:$0xf] %vm464, %v463
        %v466 = vld [vmem:[#allocation8] sm:$0xf]
        %v467 = vld [vmem:[#allocation8 + $0x4] sm:$0xf]
        %v468 = vld [vmem:[#allocation8 + $0x8] sm:$0xf]
        %v469 = vld [vmem:[#allocation8 + $0xc] sm:$0xf]
        %v470 = vld [vmem:[%s5] sm:$0x1]
        %v472 = vlaneseq
        %v473 = vshrl.u32 %v472, 7
        %v474 = vsub.s32 0, %v473
        %v475 = vrot.slane %v470, %v474
        %v481 = vunpack.c.l.b16 %v466
        %v482 = vunpack.c.l.b16 %v467
        %v483 = vunpack.c.l.b16 %v468
        %v484 = vunpack.c.l.b16 %v469
        %v485 = vpack.c.b16 %v482, %v481
        %v486 = vpack.c.b16 %v484, %v483
        %v490 = vsel %vm419, %v395, 0
        %492 = vmatprep.subr.bf16.mxu0 0
        %493 = vmatpush1.bf16.msra.mxu0 %v485
        %494 = vmatprep.subr.bf16.mxu0 0
        %495 = vmatpush1.bf16.msra.mxu0 %v486
        %496 = vmatprep.subr.bf16.mxu0 0
        %497 = vmatpush1.bf16.msra.mxu0 0
        %498 = vmatprep.subr.bf16.mxu0 0
        %499 = vmatpush1.bf16.msra.mxu0 0
        %500 = vmatprep.subr.bf16.mxu0 0
        %501 = vmatpush1.bf16.msra.mxu0 0
        %502 = vmatprep.subr.bf16.mxu0 0
        %503 = vmatpush1.bf16.msra.mxu0 0
        %504 = vmatprep.subr.bf16.mxu0 0
        %505 = vmatpush1.bf16.msra.mxu0 0
        %506 = vmatprep.subr.bf16.mxu0 0
        %507 = vmatpush1.bf16.msra.mxu0 0
        %508 = vmatprep.subr.bf16.mxu0 0
        %509 = vmatpush1.bf16.msra.mxu0 0
        %510 = vmatprep.subr.bf16.mxu0 0
        %511 = vmatpush1.bf16.msra.mxu0 0
        %512 = vmatprep.subr.bf16.mxu0 0
        %513 = vmatpush1.bf16.msra.mxu0 0
        %514 = vmatprep.subr.bf16.mxu0 0
        %515 = vmatpush1.bf16.msra.mxu0 0
        %516 = vmatprep.subr.bf16.mxu0 0
        %517 = vmatpush1.bf16.msra.mxu0 0
        %518 = vmatprep.subr.bf16.mxu0 0
        %519 = vmatpush1.bf16.msra.mxu0 0
        %520 = vmatprep.subr.bf16.mxu0 0
        %521 = vmatpush1.bf16.msra.mxu0 0
        %522 = vmatprep.subr.bf16.mxu0 0
        %523 = vmatpush1.bf16.msra.mxu0 0
        %524 = vmatprep.mubr.bf16.mxu0 0
        %525 = vmatmul.mubr.bf16.gmra.mrb[0].mxu0 %v490
        %v526 = vpop.f32.mrb[0].mxu0
        %v527 = vadd.f32 %v475, %v526
        %v528 = vpop.f32.mrb[0].mxu0
        %v529 = vpop.f32.mrb[0].mxu0
        %v530 = vpop.f32.mrb[0].mxu0
        %531 = vdwg.mxu0
        %v532 = vpack.c.bf16 %v527, %v527
        %533 = vst.msk [vmem:[%s392] sm:$0xf] %vm464, %v532
        %s534 = sand.u32 %s194, 1
        %s535 = scalar_lea.sflag [#allocation4], %s534
        %s536 = sand.u32 %s194, 1
        %s537 = smul.addr %s536, 4
        %s538 = scalar_lea.vmem [#allocation10], %s537
        %s539 = sand.u32 %s222, 1
        %s540 = scalar_lea.sflag [#allocation12], %s539
        %s541 = sand.u32 %s222, 1
        %s542 = smul.addr %s541, 4
        %s543 = scalar_lea.vmem [#allocation11], %s542
        // Predicated region
        $region61: #{tpu_custom_call.1} parent=43 // pred_check
          %p544 = pneg %p204
        $region62: #{tpu_custom_call.1} parent=43 // pred_check_branch
          %546 = sbr.rel (%p544) target = $region64
        $region63: #{tpu_custom_call.1} parent=43 // pred_region
          %s548 = ssub.s32 64, 64
          %549 = vsyncadd %s535, %s548
          %s550 = sadd.s32 %s37, %s36
          %s551 = smul.addr %s550, 64
          %s552 = scalar_lea.hbm %s6, %s551
          %s554 = sshll.u32 %s538, 4
          %s555 = int_to_ptr.vmem [resolvable:$true] %s554
          %557 = dma.vmem_to_hbm [thread:$0]  %s555, 64, %s552, %s535
        $region64: #{tpu_custom_call.1} parent=43 // pred_fallthru
          _
        // Predicated region
        $region65: #{tpu_custom_call.1} parent=43 // pred_check
          %p558 = pneg %p232
        $region66: #{tpu_custom_call.1} parent=43 // pred_check_branch
          %560 = sbr.rel (%p558) target = $region68
        $region67: #{tpu_custom_call.1} parent=43 // pred_region
          %s562 = ssub.s32 64, 64
          %563 = vsyncadd %s540, %s562
          %s564 = sadd.s32 %s37, %s36
          %s565 = smul.addr %s564, 64
          %s566 = scalar_lea.hbm %s7, %s565
          %s568 = sshll.u32 %s543, 4
          %s569 = int_to_ptr.vmem [resolvable:$true] %s568
          %571 = dma.vmem_to_hbm [thread:$0]  %s569, 64, %s566, %s540
        $region68: #{tpu_custom_call.1} parent=43 // pred_fallthru
          _
      $region44: #{tpu_custom_call.1} parent=5 // pred_fallthru
        _
      %p572 = scmp.le.s32.totalorder 2, %s27
      // Predicated region
      $region69: #{tpu_custom_call.1} parent=5 // pred_check
        %p573 = pneg %p572
      $region70: #{tpu_custom_call.1} parent=5 // pred_check_branch
        %575 = sbr.rel (%p573) target = $region72
      $region71: #{tpu_custom_call.1} parent=5 // pred_region
        %s576 = ssub.s32 %s27, 2
        // Predicated region
        $region73: #{tpu_custom_call.1} parent=71 // pred_check
          %p577 = pneg %p210
        $region74: #{tpu_custom_call.1} parent=71 // pred_check_branch
          %579 = sbr.rel (%p577) target = $region76
        $region75: #{tpu_custom_call.1} parent=71 // pred_region
          %s580 = sand.u32 %s195, 1
          %s581 = scalar_lea.sflag [#allocation4], %s580
          %s582 = sand.u32 %s195, 1
          %s583 = smul.addr %s582, 4
          %s584 = scalar_lea.vmem [#allocation10], %s583
          %585 = dma.done %s581, 64
        $region76: #{tpu_custom_call.1} parent=71 // pred_fallthru
          _
        // Predicated region
        $region77: #{tpu_custom_call.1} parent=71 // pred_check
          %p586 = pneg %p238
        $region78: #{tpu_custom_call.1} parent=71 // pred_check_branch
          %588 = sbr.rel (%p586) target = $region80
        $region79: #{tpu_custom_call.1} parent=71 // pred_region
          %s589 = sand.u32 %s223, 1
          %s590 = scalar_lea.sflag [#allocation12], %s589
          %s591 = sand.u32 %s223, 1
          %s592 = smul.addr %s591, 4
          %s593 = scalar_lea.vmem [#allocation11], %s592
          %594 = dma.done %s590, 64
        $region80: #{tpu_custom_call.1} parent=71 // pred_fallthru
          _
      $region72: #{tpu_custom_call.1} parent=5 // pred_fallthru
        _
    $region6: #{tpu_custom_call.1} parent=1 // loop_footer
      %s31 = sadd.s32 1, %s27
    $region7: #{tpu_custom_call.1} parent=1 // loop_footer_branch
      %26 = sbr.rel target = $region3
    $region8: #{tpu_custom_call.1} parent=1 // loop_exit
      _
    %595 = vsyncpa [#allocation3], 1
    %s596 = scalar_lea.sflag [#allocation3], 1
    %597 = vsyncpa %s596, 1
    %598 = vsyncpa [#allocation6], 1
    %s599 = scalar_lea.sflag [#allocation6], 1
    %600 = vsyncpa %s599, 1
    %601 = vsyncpa [#allocation9], 1
    %602 = vsyncpa [#allocation4], 1
    %s603 = scalar_lea.sflag [#allocation4], 1
    %604 = vsyncpa %s603, 1
    %605 = vsyncpa [#allocation12], 1
    %s606 = scalar_lea.sflag [#allocation12], 1
    %607 = vsyncpa %s606, 1

</llo_original>
